<compile_context>
chip_gen: v7x
topology: tpu7x:2x2x1
jax: 0.10.0
libtpu: 0.0.40
codegen_flags: <defaults>
</compile_context>

<pallas_src>
import functools
import math

import jax
import jax.numpy as jnp
from jax.experimental import pallas as pl
from jax.experimental.pallas import tpu as pltpu


_NEG_INF = -1e30


# ----------------------------- kernel helpers -----------------------------

def _layernorm(h, g, b, eps=1e-5):
    mu = jnp.mean(h, axis=-1, keepdims=True)
    var = jnp.mean(jnp.square(h - mu), axis=-1, keepdims=True)
    return (h - mu) * jax.lax.rsqrt(var + eps) * g + b


def _gelu(x):
    # tanh-approximate GELU (matches the DT MLP)
    c = math.sqrt(2.0 / math.pi)
    return 0.5 * x * (1.0 + jnp.tanh(c * (x + 0.044715 * x * x * x)))


# ------------------------------ Pallas kernel ------------------------------

def block_kernel(x_ref, ln1g, ln1b, wqkv, bqkv, wo, bo,
                 ln2g, ln2b, w1, b1, w2, b2,
                 o_ref, attn_scr, *, num_heads, seq_len):
    """One grid step: a packed row-block of Bb batch elements, x_ref is (Bb*T, D)."""
    M, D = x_ref.shape
    Bb = M // seq_len
    hd = D // num_heads
    f32 = jnp.float32
    bf16 = jnp.bfloat16

    x = x_ref[...].astype(f32)                                  # (M, D)

    # ------------- attention branch: x + W_o . attn(ln_1(x)) -------------
    h = _layernorm(x, ln1g[...], ln1b[...])
    # fused QKV projection over the packed rows: one wide K=D matmul.
    qkv = jnp.dot(h.astype(bf16), wqkv[...],
                  preferred_element_type=f32) + bqkv[...]       # (M, 3D)

    scale = 1.0 / math.sqrt(hd)

    # in-kernel causal mask, (T, T) bool, broadcast over batch & heads.
    row = jax.lax.broadcasted_iota(jnp.int32, (seq_len, seq_len), 0)
    col = jax.lax.broadcasted_iota(jnp.int32, (seq_len, seq_len), 1)
    causal = row >= col                                          # (T, T)

    for hi in range(num_heads):                                  # static head loop
        lo = hi * hd
        qh = (qkv[:, lo:lo + hd] * scale).astype(bf16).reshape(Bb, seq_len, hd)
        kh = qkv[:, D + lo:D + lo + hd].astype(bf16).reshape(Bb, seq_len, hd)
        vh = qkv[:, 2 * D + lo:2 * D + lo + hd].astype(bf16).reshape(Bb, seq_len, hd)

        # per-batch-element scores: (Bb, T, T) -- no cross-batch waste.
        s = jnp.einsum("btd,bsd->bts", qh, kh, preferred_element_type=f32)
        s = jnp.where(causal[None, :, :], s, _NEG_INF)
        s = s - jnp.max(s, axis=-1, keepdims=True)
        p = jnp.exp(s)
        p = p * pl.reciprocal(jnp.sum(p, axis=-1, keepdims=True), approx=True)

        pv = jnp.einsum("bts,bsd->btd", p.astype(bf16), vh,
                        preferred_element_type=f32)              # (Bb, T, hd)
        # plain store of this head's output at its lane offset.
        attn_scr[:, lo:lo + hd] = pv.reshape(M, hd).astype(attn_scr.dtype)

    # single output projection with full contraction depth K=D.
    y_attn = jnp.dot(attn_scr[...], wo[...],
                     preferred_element_type=f32) + bo[...]       # (M, D)
    x1 = x + y_attn                       # dropout_1: identity (eval mode)

    # ----------------- MLP branch: x1 + mlp(ln_2(x1)) -----------------
    # (for large D, tile over the 4D hidden dim; unnecessary at these shapes)
    h2 = _layernorm(x1, ln2g[...], ln2b[...])
    m = jnp.dot(h2.astype(bf16), w1[...], preferred_element_type=f32) + b1[...]
    m = _gelu(m)
    m = jnp.dot(m.astype(bf16), w2[...], preferred_element_type=f32) + b2[...]
    # dropout_2: identity (eval mode)
    o_ref[...] = (x1 + m).astype(o_ref.dtype)


# ------------------------------ host wrapper -------------------------------

def _vmem_capacity_bytes():
    try:
        info = pltpu.get_tpu_info()
        return int(getattr(info, "vmem_capacity_bytes", 64 << 20))
    except Exception:
        return 64 << 20


def _pick_batch_block(B, T, vmem_bytes):
    """Largest divisor Bb of B such that:
       * Bb*T rows fit a VMEM-aware cap (smaller on 64 MiB v7x),
       * the grid keeps >= 2 steps when B >= 2 (feed both v7x TensorCores),
       * Bb*T is a multiple of 8 (sublane-aligned row block)."""
    max_rows = 1024 if vmem_bytes >= (100 << 20) else 512
    best = 0
    for bb in range(B, 0, -1):
        if B % bb:
            continue
        if bb * T > max_rows:
            continue
        if B >= 2 and (B // bb) < 2:
            continue
        if (bb * T) % 8:
            continue
        best = bb
        break
    if best == 0:
        # fall back to a full-extent row block (bypasses the (8,128) rule).
        best = B
    return best


def block_forward(x, params, num_heads):
    B, T, D = x.shape
    assert D % num_heads == 0, "embed_dim must be divisible by num_heads"

    vmem_bytes = _vmem_capacity_bytes()
    Bb = _pick_batch_block(B, T, vmem_bytes)
    M = Bb * T
    n_blocks = B // Bb

    # ---- fuse / cast parameters (bf16 matmul operands, f32 biases & LN) ----
    wqkv = jnp.concatenate([params["wq"], params["wk"], params["wv"]],
                           axis=1).astype(jnp.bfloat16)               # (D, 3D)
    bqkv = jnp.concatenate([params["bq"], params["bk"], params["bv"]],
                           axis=1).astype(jnp.float32)                # (1, 3D)
    weights = [
        params["ln1_g"].astype(jnp.float32), params["ln1_b"].astype(jnp.float32),
        wqkv, bqkv,
        params["wo"].astype(jnp.bfloat16), params["bo"].astype(jnp.float32),
        params["ln2_g"].astype(jnp.float32), params["ln2_b"].astype(jnp.float32),
        params["w1"].astype(jnp.bfloat16), params["b1"].astype(jnp.float32),
        params["w2"].astype(jnp.bfloat16), params["b2"].astype(jnp.float32),
    ]

    x2d = x.reshape(B * T, D)

    def full_spec(a):
        nd = a.ndim
        return pl.BlockSpec(a.shape, lambda i, _nd=nd: (0,) * _nd)

    in_specs = ([pl.BlockSpec((M, D), lambda i: (i, 0))]
                + [full_spec(w) for w in weights])
    out_spec = pl.BlockSpec((M, D), lambda i: (i, 0))

    vmem_limit = min(int(0.85 * vmem_bytes), 96 << 20)

    out = pl.pallas_call(
        functools.partial(block_kernel, num_heads=num_heads, seq_len=T),
        out_shape=jax.ShapeDtypeStruct((B * T, D), x.dtype),
        grid=(n_blocks,),
        in_specs=in_specs,
        out_specs=out_spec,
        scratch_shapes=[pltpu.VMEM((M, D), jnp.bfloat16)],   # per-head PV landing pad
        compiler_params=pltpu.CompilerParams(
            dimension_semantics=("parallel",),
            vmem_limit_bytes=vmem_limit),
    )(x2d, *weights)
    return out.reshape(B, T, D)


# -------------------------- pure-JAX reference -----------------------------

def block_reference(x, params, num_heads):
    B, T, D = x.shape
    hd = D // num_heads
    p = params

    def ln(h, g, b):
        mu = jnp.mean(h, -1, keepdims=True)
        var = jnp.mean(jnp.square(h - mu), -1, keepdims=True)
        return (h - mu) * jax.lax.rsqrt(var + 1e-5) * g + b

    h = ln(x, p["ln1_g"], p["ln1_b"])
    q = h @ p["wq"] + p["bq"]
    k = h @ p["wk"] + p["bk"]
    v = h @ p["wv"] + p["bv"]
    q = q.reshape(B, T, num_heads, hd).transpose(0, 2, 1, 3)
    k = k.reshape(B, T, num_heads, hd).transpose(0, 2, 1, 3)
    v = v.reshape(B, T, num_heads, hd).transpose(0, 2, 1, 3)
    s = jnp.einsum("bhtd,bhsd->bhts", q, k) / math.sqrt(hd)
    causal = jnp.tril(jnp.ones((T, T), bool))[None, None]
    s = jnp.where(causal, s, _NEG_INF)
    a = jax.nn.softmax(s, axis=-1)
    o = jnp.einsum("bhts,bhsd->bhtd", a, v).transpose(0, 2, 1, 3).reshape(B, T, D)
    o = o @ p["wo"] + p["bo"]
    x1 = x + o
    h2 = ln(x1, p["ln2_g"], p["ln2_b"])
    m = h2 @ p["w1"] + p["b1"]
    m = 0.5 * m * (1.0 + jnp.tanh(math.sqrt(2.0 / math.pi) * (m + 0.044715 * m ** 3)))
    m = m @ p["w2"] + p["b2"]
    return x1 + m


# --------------------------------- params ----------------------------------

def init_params(key, embed_dim, init_scale=0.02):
    D = embed_dim
    ks = jax.random.split(key, 6)

    def lin(k, fan_in, fan_out):
        return (jax.random.normal(k, (fan_in, fan_out), jnp.float32)
                * init_scale / math.sqrt(fan_in))

    return {
        "ln1_g": jnp.ones((1, D), jnp.float32),
        "ln1_b": jnp.zeros((1, D), jnp.float32),
        "wq": lin(ks[0], D, D), "bq": jnp.zeros((1, D), jnp.float32),
        "wk": lin(ks[1], D, D), "bk": jnp.zeros((1, D), jnp.float32),
        "wv": lin(ks[2], D, D), "bv": jnp.zeros((1, D), jnp.float32),
        "wo": lin(ks[3], D, D), "bo": jnp.zeros((1, D), jnp.float32),
        "ln2_g": jnp.ones((1, D), jnp.float32),
        "ln2_b": jnp.zeros((1, D), jnp.float32),
        "w1": lin(ks[4], D, 4 * D), "b1": jnp.zeros((1, 4 * D), jnp.float32),
        "w2": lin(ks[5], 4 * D, D), "b2": jnp.zeros((1, D), jnp.float32),
    }


# ----------------------------------- main -----------------------------------

if __name__ == "__main__":
    B, T, D, H = 2, 8, 32, 4       # batch, seq, embed_dim, num_heads

    key = jax.random.PRNGKey(0)
    kx, kp = jax.random.split(key)
    x = jax.random.normal(kx, (B, T, D), jnp.float32)
    params = init_params(kp, D, init_scale=0.02)

    out = block_forward(x, params, num_heads=H)
    out = jax.block_until_ready(out)

    ref = block_reference(x, params, num_heads=H)
    assert out.shape == (B, T, D)
    # bf16 MXU operands + approx reciprocal -> looser tolerance than pure f32
    assert jnp.allclose(out, ref, rtol=2e-2, atol=2e-2), "mismatch vs JAX reference"

    print("KERNEL_OK")
</pallas_src>

<mosaic_0001>
module attributes {stable_mosaic.version = 11 : i64} {
  func.func @block_kernel(%arg0: i32, %arg1: memref<8x32xf32, #tpu.memory_space<vmem>>, %arg2: memref<1x32xf32, #tpu.memory_space<vmem>>, %arg3: memref<1x32xf32, #tpu.memory_space<vmem>>, %arg4: memref<32x96xbf16, #tpu.memory_space<vmem>>, %arg5: memref<1x96xf32, #tpu.memory_space<vmem>>, %arg6: memref<32x32xbf16, #tpu.memory_space<vmem>>, %arg7: memref<1x32xf32, #tpu.memory_space<vmem>>, %arg8: memref<1x32xf32, #tpu.memory_space<vmem>>, %arg9: memref<1x32xf32, #tpu.memory_space<vmem>>, %arg10: memref<32x128xbf16, #tpu.memory_space<vmem>>, %arg11: memref<1x128xf32, #tpu.memory_space<vmem>>, %arg12: memref<128x32xbf16, #tpu.memory_space<vmem>>, %arg13: memref<1x32xf32, #tpu.memory_space<vmem>>, %arg14: memref<8x32xf32, #tpu.memory_space<vmem>>, %arg15: memref<8x32xbf16, #tpu.memory_space<vmem>>) attributes {dimension_semantics = [#tpu.dimension_semantics<parallel>], iteration_bounds = array<i64: 2>, scalar_prefetch = 0 : i64, scratch_operands = 1 : i64, tpu.core_type = #tpu.core_type<tc>, window_params = [{transform_indices = @transform_0, window_bounds = array<i64: 8, 32>}, {pipeline_mode = #tpu.pipeline_mode<synchronous>, transform_indices = @transform_1, window_bounds = array<i64: 1, 32>}, {pipeline_mode = #tpu.pipeline_mode<synchronous>, transform_indices = @transform_2, window_bounds = array<i64: 1, 32>}, {pipeline_mode = #tpu.pipeline_mode<synchronous>, transform_indices = @transform_3, window_bounds = array<i64: 32, 96>}, {pipeline_mode = #tpu.pipeline_mode<synchronous>, transform_indices = @transform_4, window_bounds = array<i64: 1, 96>}, {pipeline_mode = #tpu.pipeline_mode<synchronous>, transform_indices = @transform_5, window_bounds = array<i64: 32, 32>}, {pipeline_mode = #tpu.pipeline_mode<synchronous>, transform_indices = @transform_6, window_bounds = array<i64: 1, 32>}, {pipeline_mode = #tpu.pipeline_mode<synchronous>, transform_indices = @transform_7, window_bounds = array<i64: 1, 32>}, {pipeline_mode = #tpu.pipeline_mode<synchronous>, transform_indices = @transform_8, window_bounds = array<i64: 1, 32>}, {pipeline_mode = #tpu.pipeline_mode<synchronous>, transform_indices = @transform_9, window_bounds = array<i64: 32, 128>}, {pipeline_mode = #tpu.pipeline_mode<synchronous>, transform_indices = @transform_10, window_bounds = array<i64: 1, 128>}, {pipeline_mode = #tpu.pipeline_mode<synchronous>, transform_indices = @transform_11, window_bounds = array<i64: 128, 32>}, {pipeline_mode = #tpu.pipeline_mode<synchronous>, transform_indices = @transform_12, window_bounds = array<i64: 1, 32>}, {transform_indices = @transform_13, window_bounds = array<i64: 8, 32>}]} {
    %c0 = arith.constant 0 : index
    %c0_0 = arith.constant 0 : index
    %0 = vector.load %arg1[%c0, %c0_0] : memref<8x32xf32, #tpu.memory_space<vmem>>, vector<8x32xf32>
    %c0_1 = arith.constant 0 : index
    %c0_2 = arith.constant 0 : index
    %1 = vector.load %arg2[%c0_1, %c0_2] : memref<1x32xf32, #tpu.memory_space<vmem>>, vector<1x32xf32>
    %c0_3 = arith.constant 0 : index
    %c0_4 = arith.constant 0 : index
    %2 = vector.load %arg3[%c0_3, %c0_4] : memref<1x32xf32, #tpu.memory_space<vmem>>, vector<1x32xf32>
    %cst = arith.constant dense<0.000000e+00> : vector<8xf32>
    %3 = vector.multi_reduction <add>, %0, %cst [1] : vector<8x32xf32> to vector<8xf32>
    %4 = vector.shape_cast %3 : vector<8xf32> to vector<8x1xf32>
    %cst_5 = arith.constant 3.200000e+01 : f32
    %5 = vector.broadcast %cst_5 : f32 to vector<8x1xf32>
    %6 = arith.divf %4, %5 : vector<8x1xf32>
    %7 = vector.broadcast %6 : vector<8x1xf32> to vector<8x32xf32>
    %8 = arith.subf %0, %7 : vector<8x32xf32>
    %9 = arith.mulf %8, %8 : vector<8x32xf32>
    %cst_6 = arith.constant dense<0.000000e+00> : vector<8xf32>
    %10 = vector.multi_reduction <add>, %9, %cst_6 [1] : vector<8x32xf32> to vector<8xf32>
    %11 = vector.shape_cast %10 : vector<8xf32> to vector<8x1xf32>
    %cst_7 = arith.constant 3.200000e+01 : f32
    %12 = vector.broadcast %cst_7 : f32 to vector<8x1xf32>
    %13 = arith.divf %11, %12 : vector<8x1xf32>
    %14 = vector.broadcast %6 : vector<8x1xf32> to vector<8x32xf32>
    %15 = arith.subf %0, %14 : vector<8x32xf32>
    %cst_8 = arith.constant 9.99999974E-6 : f32
    %16 = vector.broadcast %cst_8 : f32 to vector<8x1xf32>
    %17 = arith.addf %13, %16 : vector<8x1xf32>
    %18 = math.rsqrt %17 : vector<8x1xf32>
    %19 = vector.broadcast %18 : vector<8x1xf32> to vector<8x32xf32>
    %20 = arith.mulf %15, %19 : vector<8x32xf32>
    %21 = vector.broadcast %1 : vector<1x32xf32> to vector<8x32xf32>
    %22 = arith.mulf %20, %21 : vector<8x32xf32>
    %23 = vector.broadcast %2 : vector<1x32xf32> to vector<8x32xf32>
    %24 = arith.addf %22, %23 : vector<8x32xf32>
    %25 = arith.truncf %24 : vector<8x32xf32> to vector<8x32xbf16>
    %c0_9 = arith.constant 0 : index
    %c0_10 = arith.constant 0 : index
    %26 = vector.load %arg4[%c0_9, %c0_10] : memref<32x96xbf16, #tpu.memory_space<vmem>>, vector<32x96xbf16>
    %cst_11 = arith.constant dense<0.000000e+00> : vector<8x96xf32>
    %27 = tpu.matmul %25, %26, %cst_11 {dimension_numbers = #tpu.dot_dimension_numbers<[1], [0], [0], [1], [0, 0, 1, 1], [], []>} : vector<8x32xbf16>, vector<32x96xbf16>, vector<8x96xf32> -> vector<8x96xf32>
    %c0_12 = arith.constant 0 : index
    %c0_13 = arith.constant 0 : index
    %28 = vector.load %arg5[%c0_12, %c0_13] : memref<1x96xf32, #tpu.memory_space<vmem>>, vector<1x96xf32>
    %29 = vector.broadcast %28 : vector<1x96xf32> to vector<8x96xf32>
    %30 = arith.addf %27, %29 : vector<8x96xf32>
    %31 = tpu.iota {dimensions = array<i32: 0>} : vector<8x8xi32>
    %32 = tpu.iota {dimensions = array<i32: 1>} : vector<8x8xi32>
    %33 = arith.cmpi sge, %31, %32 : vector<8x8xi32>
    %34 = vector.extract_strided_slice %30 {offsets = [0, 0], sizes = [8, 8], strides = [1, 1]} : vector<8x96xf32> to vector<8x8xf32>
    %cst_14 = arith.constant 0.353553385 : f32
    %35 = vector.broadcast %cst_14 : f32 to vector<8x8xf32>
    %36 = arith.mulf %34, %35 : vector<8x8xf32>
    %37 = arith.truncf %36 : vector<8x8xf32> to vector<8x8xbf16>
    %38 = vector.shape_cast %37 : vector<8x8xbf16> to vector<1x8x8xbf16>
    %39 = vector.extract_strided_slice %30 {offsets = [0, 32], sizes = [8, 8], strides = [1, 1]} : vector<8x96xf32> to vector<8x8xf32>
    %40 = arith.truncf %39 : vector<8x8xf32> to vector<8x8xbf16>
    %41 = vector.shape_cast %40 : vector<8x8xbf16> to vector<1x8x8xbf16>
    %42 = vector.extract_strided_slice %30 {offsets = [0, 64], sizes = [8, 8], strides = [1, 1]} : vector<8x96xf32> to vector<8x8xf32>
    %43 = arith.truncf %42 : vector<8x8xf32> to vector<8x8xbf16>
    %44 = vector.shape_cast %43 : vector<8x8xbf16> to vector<1x8x8xbf16>
    "tpu.trace_start"() <{level = 10 : i32, message = "btd,bsd->bts"}> : () -> ()
    %cst_15 = arith.constant dense<0.000000e+00> : vector<1x8x8xf32>
    %45 = tpu.matmul %38, %41, %cst_15 {dimension_numbers = #tpu.dot_dimension_numbers<[2], [2], [1], [1], [0, 0, 0, 1, 1, 1], [0], [0]>} : vector<1x8x8xbf16>, vector<1x8x8xbf16>, vector<1x8x8xf32> -> vector<1x8x8xf32>
    "tpu.trace_stop"() : () -> ()
    %46 = vector.shape_cast %33 : vector<8x8xi1> to vector<1x8x8xi1>
    %cst_16 = arith.constant -1.000000e+30 : f32
    %47 = vector.broadcast %cst_16 : f32 to vector<1x8x8xf32>
    %48 = arith.select %46, %45, %47 : vector<1x8x8xi1>, vector<1x8x8xf32>
    %cst_17 = arith.constant dense<0xFF800000> : vector<1x8xf32>
    %49 = vector.multi_reduction <maximumf>, %48, %cst_17 [2] : vector<1x8x8xf32> to vector<1x8xf32>
    %50 = vector.shape_cast %49 : vector<1x8xf32> to vector<1x8x1xf32>
    %51 = vector.broadcast %50 : vector<1x8x1xf32> to vector<1x8x8xf32>
    %52 = arith.subf %48, %51 : vector<1x8x8xf32>
    %53 = math.exp %52 : vector<1x8x8xf32>
    %cst_18 = arith.constant dense<0.000000e+00> : vector<1x8xf32>
    %54 = vector.multi_reduction <add>, %53, %cst_18 [2] : vector<1x8x8xf32> to vector<1x8xf32>
    %55 = vector.shape_cast %54 : vector<1x8xf32> to vector<1x8x1xf32>
    %56 = tpu.reciprocal %55 {approx = true} : vector<1x8x1xf32> -> vector<1x8x1xf32>
    %57 = vector.broadcast %56 : vector<1x8x1xf32> to vector<1x8x8xf32>
    %58 = arith.mulf %53, %57 : vector<1x8x8xf32>
    %59 = arith.truncf %58 : vector<1x8x8xf32> to vector<1x8x8xbf16>
    "tpu.trace_start"() <{level = 10 : i32, message = "bts,bsd->btd"}> : () -> ()
    %cst_19 = arith.constant dense<0.000000e+00> : vector<1x8x8xf32>
    %60 = tpu.matmul %59, %44, %cst_19 {dimension_numbers = #tpu.dot_dimension_numbers<[2], [1], [1], [2], [0, 0, 0, 1, 1, 2], [0], [0]>} : vector<1x8x8xbf16>, vector<1x8x8xbf16>, vector<1x8x8xf32> -> vector<1x8x8xf32>
    "tpu.trace_stop"() : () -> ()
    %61 = vector.shape_cast %60 : vector<1x8x8xf32> to vector<8x8xf32>
    %62 = arith.truncf %61 : vector<8x8xf32> to vector<8x8xbf16>
    %c0_20 = arith.constant 0 : index
    %c0_21 = arith.constant 0 : index
    %63 = vector.load %arg15[%c0_20, %c0_21] : memref<8x32xbf16, #tpu.memory_space<vmem>>, vector<8x8xbf16>
    tpu.vector_store %arg15[%c0_20, %c0_21], %62 {strides = array<i32>} : memref<8x32xbf16, #tpu.memory_space<vmem>>, vector<8x8xbf16>,
    %64 = vector.extract_strided_slice %30 {offsets = [0, 8], sizes = [8, 8], strides = [1, 1]} : vector<8x96xf32> to vector<8x8xf32>
    %cst_22 = arith.constant 0.353553385 : f32
    %65 = vector.broadcast %cst_22 : f32 to vector<8x8xf32>
    %66 = arith.mulf %64, %65 : vector<8x8xf32>
    %67 = arith.truncf %66 : vector<8x8xf32> to vector<8x8xbf16>
    %68 = vector.shape_cast %67 : vector<8x8xbf16> to vector<1x8x8xbf16>
    %69 = vector.extract_strided_slice %30 {offsets = [0, 40], sizes = [8, 8], strides = [1, 1]} : vector<8x96xf32> to vector<8x8xf32>
    %70 = arith.truncf %69 : vector<8x8xf32> to vector<8x8xbf16>
    %71 = vector.shape_cast %70 : vector<8x8xbf16> to vector<1x8x8xbf16>
    %72 = vector.extract_strided_slice %30 {offsets = [0, 72], sizes = [8, 8], strides = [1, 1]} : vector<8x96xf32> to vector<8x8xf32>
    %73 = arith.truncf %72 : vector<8x8xf32> to vector<8x8xbf16>
    %74 = vector.shape_cast %73 : vector<8x8xbf16> to vector<1x8x8xbf16>
    "tpu.trace_start"() <{level = 10 : i32, message = "btd,bsd->bts"}> : () -> ()
    %cst_23 = arith.constant dense<0.000000e+00> : vector<1x8x8xf32>
    %75 = tpu.matmul %68, %71, %cst_23 {dimension_numbers = #tpu.dot_dimension_numbers<[2], [2], [1], [1], [0, 0, 0, 1, 1, 1], [0], [0]>} : vector<1x8x8xbf16>, vector<1x8x8xbf16>, vector<1x8x8xf32> -> vector<1x8x8xf32>
    "tpu.trace_stop"() : () -> ()
    %76 = vector.shape_cast %33 : vector<8x8xi1> to vector<1x8x8xi1>
    %cst_24 = arith.constant -1.000000e+30 : f32
    %77 = vector.broadcast %cst_24 : f32 to vector<1x8x8xf32>
    %78 = arith.select %76, %75, %77 : vector<1x8x8xi1>, vector<1x8x8xf32>
    %cst_25 = arith.constant dense<0xFF800000> : vector<1x8xf32>
    %79 = vector.multi_reduction <maximumf>, %78, %cst_25 [2] : vector<1x8x8xf32> to vector<1x8xf32>
    %80 = vector.shape_cast %79 : vector<1x8xf32> to vector<1x8x1xf32>
    %81 = vector.broadcast %80 : vector<1x8x1xf32> to vector<1x8x8xf32>
    %82 = arith.subf %78, %81 : vector<1x8x8xf32>
    %83 = math.exp %82 : vector<1x8x8xf32>
    %cst_26 = arith.constant dense<0.000000e+00> : vector<1x8xf32>
    %84 = vector.multi_reduction <add>, %83, %cst_26 [2] : vector<1x8x8xf32> to vector<1x8xf32>
    %85 = vector.shape_cast %84 : vector<1x8xf32> to vector<1x8x1xf32>
    %86 = tpu.reciprocal %85 {approx = true} : vector<1x8x1xf32> -> vector<1x8x1xf32>
    %87 = vector.broadcast %86 : vector<1x8x1xf32> to vector<1x8x8xf32>
    %88 = arith.mulf %83, %87 : vector<1x8x8xf32>
    %89 = arith.truncf %88 : vector<1x8x8xf32> to vector<1x8x8xbf16>
    "tpu.trace_start"() <{level = 10 : i32, message = "bts,bsd->btd"}> : () -> ()
    %cst_27 = arith.constant dense<0.000000e+00> : vector<1x8x8xf32>
    %90 = tpu.matmul %89, %74, %cst_27 {dimension_numbers = #tpu.dot_dimension_numbers<[2], [1], [1], [2], [0, 0, 0, 1, 1, 2], [0], [0]>} : vector<1x8x8xbf16>, vector<1x8x8xbf16>, vector<1x8x8xf32> -> vector<1x8x8xf32>
    "tpu.trace_stop"() : () -> ()
    %91 = vector.shape_cast %90 : vector<1x8x8xf32> to vector<8x8xf32>
    %92 = arith.truncf %91 : vector<8x8xf32> to vector<8x8xbf16>
    %c0_28 = arith.constant 0 : index
    %c8 = arith.constant 8 : index
    %93 = vector.load %arg15[%c0_28, %c8] : memref<8x32xbf16, #tpu.memory_space<vmem>>, vector<8x8xbf16>
    tpu.vector_store %arg15[%c0_28, %c8], %92 {strides = array<i32>} : memref<8x32xbf16, #tpu.memory_space<vmem>>, vector<8x8xbf16>,
    %94 = vector.extract_strided_slice %30 {offsets = [0, 16], sizes = [8, 8], strides = [1, 1]} : vector<8x96xf32> to vector<8x8xf32>
    %cst_29 = arith.constant 0.353553385 : f32
    %95 = vector.broadcast %cst_29 : f32 to vector<8x8xf32>
    %96 = arith.mulf %94, %95 : vector<8x8xf32>
    %97 = arith.truncf %96 : vector<8x8xf32> to vector<8x8xbf16>
    %98 = vector.shape_cast %97 : vector<8x8xbf16> to vector<1x8x8xbf16>
    %99 = vector.extract_strided_slice %30 {offsets = [0, 48], sizes = [8, 8], strides = [1, 1]} : vector<8x96xf32> to vector<8x8xf32>
    %100 = arith.truncf %99 : vector<8x8xf32> to vector<8x8xbf16>
    %101 = vector.shape_cast %100 : vector<8x8xbf16> to vector<1x8x8xbf16>
    %102 = vector.extract_strided_slice %30 {offsets = [0, 80], sizes = [8, 8], strides = [1, 1]} : vector<8x96xf32> to vector<8x8xf32>
    %103 = arith.truncf %102 : vector<8x8xf32> to vector<8x8xbf16>
    %104 = vector.shape_cast %103 : vector<8x8xbf16> to vector<1x8x8xbf16>
    "tpu.trace_start"() <{level = 10 : i32, message = "btd,bsd->bts"}> : () -> ()
    %cst_30 = arith.constant dense<0.000000e+00> : vector<1x8x8xf32>
    %105 = tpu.matmul %98, %101, %cst_30 {dimension_numbers = #tpu.dot_dimension_numbers<[2], [2], [1], [1], [0, 0, 0, 1, 1, 1], [0], [0]>} : vector<1x8x8xbf16>, vector<1x8x8xbf16>, vector<1x8x8xf32> -> vector<1x8x8xf32>
    "tpu.trace_stop"() : () -> ()
    %106 = vector.shape_cast %33 : vector<8x8xi1> to vector<1x8x8xi1>
    %cst_31 = arith.constant -1.000000e+30 : f32
    %107 = vector.broadcast %cst_31 : f32 to vector<1x8x8xf32>
    %108 = arith.select %106, %105, %107 : vector<1x8x8xi1>, vector<1x8x8xf32>
    %cst_32 = arith.constant dense<0xFF800000> : vector<1x8xf32>
    %109 = vector.multi_reduction <maximumf>, %108, %cst_32 [2] : vector<1x8x8xf32> to vector<1x8xf32>
    %110 = vector.shape_cast %109 : vector<1x8xf32> to vector<1x8x1xf32>
    %111 = vector.broadcast %110 : vector<1x8x1xf32> to vector<1x8x8xf32>
    %112 = arith.subf %108, %111 : vector<1x8x8xf32>
    %113 = math.exp %112 : vector<1x8x8xf32>
    %cst_33 = arith.constant dense<0.000000e+00> : vector<1x8xf32>
    %114 = vector.multi_reduction <add>, %113, %cst_33 [2] : vector<1x8x8xf32> to vector<1x8xf32>
    %115 = vector.shape_cast %114 : vector<1x8xf32> to vector<1x8x1xf32>
    %116 = tpu.reciprocal %115 {approx = true} : vector<1x8x1xf32> -> vector<1x8x1xf32>
    %117 = vector.broadcast %116 : vector<1x8x1xf32> to vector<1x8x8xf32>
    %118 = arith.mulf %113, %117 : vector<1x8x8xf32>
    %119 = arith.truncf %118 : vector<1x8x8xf32> to vector<1x8x8xbf16>
    "tpu.trace_start"() <{level = 10 : i32, message = "bts,bsd->btd"}> : () -> ()
    %cst_34 = arith.constant dense<0.000000e+00> : vector<1x8x8xf32>
    %120 = tpu.matmul %119, %104, %cst_34 {dimension_numbers = #tpu.dot_dimension_numbers<[2], [1], [1], [2], [0, 0, 0, 1, 1, 2], [0], [0]>} : vector<1x8x8xbf16>, vector<1x8x8xbf16>, vector<1x8x8xf32> -> vector<1x8x8xf32>
    "tpu.trace_stop"() : () -> ()
    %121 = vector.shape_cast %120 : vector<1x8x8xf32> to vector<8x8xf32>
    %122 = arith.truncf %121 : vector<8x8xf32> to vector<8x8xbf16>
    %c0_35 = arith.constant 0 : index
    %c16 = arith.constant 16 : index
    %123 = vector.load %arg15[%c0_35, %c16] : memref<8x32xbf16, #tpu.memory_space<vmem>>, vector<8x8xbf16>
    tpu.vector_store %arg15[%c0_35, %c16], %122 {strides = array<i32>} : memref<8x32xbf16, #tpu.memory_space<vmem>>, vector<8x8xbf16>,
    %124 = vector.extract_strided_slice %30 {offsets = [0, 24], sizes = [8, 8], strides = [1, 1]} : vector<8x96xf32> to vector<8x8xf32>
    %cst_36 = arith.constant 0.353553385 : f32
    %125 = vector.broadcast %cst_36 : f32 to vector<8x8xf32>
    %126 = arith.mulf %124, %125 : vector<8x8xf32>
    %127 = arith.truncf %126 : vector<8x8xf32> to vector<8x8xbf16>
    %128 = vector.shape_cast %127 : vector<8x8xbf16> to vector<1x8x8xbf16>
    %129 = vector.extract_strided_slice %30 {offsets = [0, 56], sizes = [8, 8], strides = [1, 1]} : vector<8x96xf32> to vector<8x8xf32>
    %130 = arith.truncf %129 : vector<8x8xf32> to vector<8x8xbf16>
    %131 = vector.shape_cast %130 : vector<8x8xbf16> to vector<1x8x8xbf16>
    %132 = vector.extract_strided_slice %30 {offsets = [0, 88], sizes = [8, 8], strides = [1, 1]} : vector<8x96xf32> to vector<8x8xf32>
    %133 = arith.truncf %132 : vector<8x8xf32> to vector<8x8xbf16>
    %134 = vector.shape_cast %133 : vector<8x8xbf16> to vector<1x8x8xbf16>
    "tpu.trace_start"() <{level = 10 : i32, message = "btd,bsd->bts"}> : () -> ()
    %cst_37 = arith.constant dense<0.000000e+00> : vector<1x8x8xf32>
    %135 = tpu.matmul %128, %131, %cst_37 {dimension_numbers = #tpu.dot_dimension_numbers<[2], [2], [1], [1], [0, 0, 0, 1, 1, 1], [0], [0]>} : vector<1x8x8xbf16>, vector<1x8x8xbf16>, vector<1x8x8xf32> -> vector<1x8x8xf32>
    "tpu.trace_stop"() : () -> ()
    %136 = vector.shape_cast %33 : vector<8x8xi1> to vector<1x8x8xi1>
    %cst_38 = arith.constant -1.000000e+30 : f32
    %137 = vector.broadcast %cst_38 : f32 to vector<1x8x8xf32>
    %138 = arith.select %136, %135, %137 : vector<1x8x8xi1>, vector<1x8x8xf32>
    %cst_39 = arith.constant dense<0xFF800000> : vector<1x8xf32>
    %139 = vector.multi_reduction <maximumf>, %138, %cst_39 [2] : vector<1x8x8xf32> to vector<1x8xf32>
    %140 = vector.shape_cast %139 : vector<1x8xf32> to vector<1x8x1xf32>
    %141 = vector.broadcast %140 : vector<1x8x1xf32> to vector<1x8x8xf32>
    %142 = arith.subf %138, %141 : vector<1x8x8xf32>
    %143 = math.exp %142 : vector<1x8x8xf32>
    %cst_40 = arith.constant dense<0.000000e+00> : vector<1x8xf32>
    %144 = vector.multi_reduction <add>, %143, %cst_40 [2] : vector<1x8x8xf32> to vector<1x8xf32>
    %145 = vector.shape_cast %144 : vector<1x8xf32> to vector<1x8x1xf32>
    %146 = tpu.reciprocal %145 {approx = true} : vector<1x8x1xf32> -> vector<1x8x1xf32>
    %147 = vector.broadcast %146 : vector<1x8x1xf32> to vector<1x8x8xf32>
    %148 = arith.mulf %143, %147 : vector<1x8x8xf32>
    %149 = arith.truncf %148 : vector<1x8x8xf32> to vector<1x8x8xbf16>
    "tpu.trace_start"() <{level = 10 : i32, message = "bts,bsd->btd"}> : () -> ()
    %cst_41 = arith.constant dense<0.000000e+00> : vector<1x8x8xf32>
    %150 = tpu.matmul %149, %134, %cst_41 {dimension_numbers = #tpu.dot_dimension_numbers<[2], [1], [1], [2], [0, 0, 0, 1, 1, 2], [0], [0]>} : vector<1x8x8xbf16>, vector<1x8x8xbf16>, vector<1x8x8xf32> -> vector<1x8x8xf32>
    "tpu.trace_stop"() : () -> ()
    %151 = vector.shape_cast %150 : vector<1x8x8xf32> to vector<8x8xf32>
    %152 = arith.truncf %151 : vector<8x8xf32> to vector<8x8xbf16>
    %c0_42 = arith.constant 0 : index
    %c24 = arith.constant 24 : index
    %153 = vector.load %arg15[%c0_42, %c24] : memref<8x32xbf16, #tpu.memory_space<vmem>>, vector<8x8xbf16>
    tpu.vector_store %arg15[%c0_42, %c24], %152 {strides = array<i32>} : memref<8x32xbf16, #tpu.memory_space<vmem>>, vector<8x8xbf16>,
    %c0_43 = arith.constant 0 : index
    %c0_44 = arith.constant 0 : index
    %154 = vector.load %arg15[%c0_43, %c0_44] : memref<8x32xbf16, #tpu.memory_space<vmem>>, vector<8x32xbf16>
    %c0_45 = arith.constant 0 : index
    %c0_46 = arith.constant 0 : index
    %155 = vector.load %arg6[%c0_45, %c0_46] : memref<32x32xbf16, #tpu.memory_space<vmem>>, vector<32x32xbf16>
    %cst_47 = arith.constant dense<0.000000e+00> : vector<8x32xf32>
    %156 = tpu.matmul %154, %155, %cst_47 {dimension_numbers = #tpu.dot_dimension_numbers<[1], [0], [0], [1], [0, 0, 1, 1], [], []>} : vector<8x32xbf16>, vector<32x32xbf16>, vector<8x32xf32> -> vector<8x32xf32>
    %c0_48 = arith.constant 0 : index
    %c0_49 = arith.constant 0 : index
    %157 = vector.load %arg7[%c0_48, %c0_49] : memref<1x32xf32, #tpu.memory_space<vmem>>, vector<1x32xf32>
    %158 = vector.broadcast %157 : vector<1x32xf32> to vector<8x32xf32>
    %159 = arith.addf %156, %158 : vector<8x32xf32>
    %160 = arith.addf %0, %159 : vector<8x32xf32>
    %c0_50 = arith.constant 0 : index
    %c0_51 = arith.constant 0 : index
    %161 = vector.load %arg8[%c0_50, %c0_51] : memref<1x32xf32, #tpu.memory_space<vmem>>, vector<1x32xf32>
    %c0_52 = arith.constant 0 : index
    %c0_53 = arith.constant 0 : index
    %162 = vector.load %arg9[%c0_52, %c0_53] : memref<1x32xf32, #tpu.memory_space<vmem>>, vector<1x32xf32>
    %cst_54 = arith.constant dense<0.000000e+00> : vector<8xf32>
    %163 = vector.multi_reduction <add>, %160, %cst_54 [1] : vector<8x32xf32> to vector<8xf32>
    %164 = vector.shape_cast %163 : vector<8xf32> to vector<8x1xf32>
    %cst_55 = arith.constant 3.200000e+01 : f32
    %165 = vector.broadcast %cst_55 : f32 to vector<8x1xf32>
    %166 = arith.divf %164, %165 : vector<8x1xf32>
    %167 = vector.broadcast %166 : vector<8x1xf32> to vector<8x32xf32>
    %168 = arith.subf %160, %167 : vector<8x32xf32>
    %169 = arith.mulf %168, %168 : vector<8x32xf32>
    %cst_56 = arith.constant dense<0.000000e+00> : vector<8xf32>
    %170 = vector.multi_reduction <add>, %169, %cst_56 [1] : vector<8x32xf32> to vector<8xf32>
    %171 = vector.shape_cast %170 : vector<8xf32> to vector<8x1xf32>
    %cst_57 = arith.constant 3.200000e+01 : f32
    %172 = vector.broadcast %cst_57 : f32 to vector<8x1xf32>
    %173 = arith.divf %171, %172 : vector<8x1xf32>
    %174 = vector.broadcast %166 : vector<8x1xf32> to vector<8x32xf32>
    %175 = arith.subf %160, %174 : vector<8x32xf32>
    %cst_58 = arith.constant 9.99999974E-6 : f32
    %176 = vector.broadcast %cst_58 : f32 to vector<8x1xf32>
    %177 = arith.addf %173, %176 : vector<8x1xf32>
    %178 = math.rsqrt %177 : vector<8x1xf32>
    %179 = vector.broadcast %178 : vector<8x1xf32> to vector<8x32xf32>
    %180 = arith.mulf %175, %179 : vector<8x32xf32>
    %181 = vector.broadcast %161 : vector<1x32xf32> to vector<8x32xf32>
    %182 = arith.mulf %180, %181 : vector<8x32xf32>
    %183 = vector.broadcast %162 : vector<1x32xf32> to vector<8x32xf32>
    %184 = arith.addf %182, %183 : vector<8x32xf32>
    %185 = arith.truncf %184 : vector<8x32xf32> to vector<8x32xbf16>
    %c0_59 = arith.constant 0 : index
    %c0_60 = arith.constant 0 : index
    %186 = vector.load %arg10[%c0_59, %c0_60] : memref<32x128xbf16, #tpu.memory_space<vmem>>, vector<32x128xbf16>
    %cst_61 = arith.constant dense<0.000000e+00> : vector<8x128xf32>
    %187 = tpu.matmul %185, %186, %cst_61 {dimension_numbers = #tpu.dot_dimension_numbers<[1], [0], [0], [1], [0, 0, 1, 1], [], []>} : vector<8x32xbf16>, vector<32x128xbf16>, vector<8x128xf32> -> vector<8x128xf32>
    %c0_62 = arith.constant 0 : index
    %c0_63 = arith.constant 0 : index
    %188 = vector.load %arg11[%c0_62, %c0_63] : memref<1x128xf32, #tpu.memory_space<vmem>>, vector<1x128xf32>
    %189 = vector.broadcast %188 : vector<1x128xf32> to vector<8x128xf32>
    %190 = arith.addf %187, %189 : vector<8x128xf32>
    %cst_64 = arith.constant 5.000000e-01 : f32
    %191 = vector.broadcast %cst_64 : f32 to vector<8x128xf32>
    %192 = arith.mulf %191, %190 : vector<8x128xf32>
    %cst_65 = arith.constant 4.471500e-02 : f32
    %193 = vector.broadcast %cst_65 : f32 to vector<8x128xf32>
    %194 = arith.mulf %193, %190 : vector<8x128xf32>
    %195 = arith.mulf %194, %190 : vector<8x128xf32>
    %196 = arith.mulf %195, %190 : vector<8x128xf32>
    %197 = arith.addf %190, %196 : vector<8x128xf32>
    %cst_66 = arith.constant 0.797884583 : f32
    %198 = vector.broadcast %cst_66 : f32 to vector<8x128xf32>
    %199 = arith.mulf %198, %197 : vector<8x128xf32>
    %200 = math.tanh %199 : vector<8x128xf32>
    %cst_67 = arith.constant 1.000000e+00 : f32
    %201 = vector.broadcast %cst_67 : f32 to vector<8x128xf32>
    %202 = arith.addf %201, %200 : vector<8x128xf32>
    %203 = arith.mulf %192, %202 : vector<8x128xf32>
    %204 = arith.truncf %203 : vector<8x128xf32> to vector<8x128xbf16>
    %c0_68 = arith.constant 0 : index
    %c0_69 = arith.constant 0 : index
    %205 = vector.load %arg12[%c0_68, %c0_69] : memref<128x32xbf16, #tpu.memory_space<vmem>>, vector<128x32xbf16>
    %cst_70 = arith.constant dense<0.000000e+00> : vector<8x32xf32>
    %206 = tpu.matmul %204, %205, %cst_70 {dimension_numbers = #tpu.dot_dimension_numbers<[1], [0], [0], [1], [0, 0, 1, 1], [], []>} : vector<8x128xbf16>, vector<128x32xbf16>, vector<8x32xf32> -> vector<8x32xf32>
    %c0_71 = arith.constant 0 : index
    %c0_72 = arith.constant 0 : index
    %207 = vector.load %arg13[%c0_71, %c0_72] : memref<1x32xf32, #tpu.memory_space<vmem>>, vector<1x32xf32>
    %208 = vector.broadcast %207 : vector<1x32xf32> to vector<8x32xf32>
    %209 = arith.addf %206, %208 : vector<8x32xf32>
    %210 = arith.addf %160, %209 : vector<8x32xf32>
    %c0_73 = arith.constant 0 : index
    %c0_74 = arith.constant 0 : index
    %211 = vector.load %arg14[%c0_73, %c0_74] : memref<8x32xf32, #tpu.memory_space<vmem>>, vector<8x32xf32>
    tpu.vector_store %arg14[%c0_73, %c0_74], %210 {strides = array<i32>} : memref<8x32xf32, #tpu.memory_space<vmem>>, vector<8x32xf32>,
    return
  }
  func.func @transform_0(%arg0: i32) -> (i32, i32) {
    %c0_i32 = arith.constant 0 : i32
    %c0_i32_0 = arith.constant 0 : i32
    return %arg0, %c0_i32 : i32, i32
  }
  func.func @transform_1(%arg0: i32) -> (i32, i32) {
    %c0_i32 = arith.constant 0 : i32
    %c0_i32_0 = arith.constant 0 : i32
    %c0_i32_1 = arith.constant 0 : i32
    return %c0_i32, %c0_i32_0 : i32, i32
  }
  func.func @transform_2(%arg0: i32) -> (i32, i32) {
    %c0_i32 = arith.constant 0 : i32
    %c0_i32_0 = arith.constant 0 : i32
    %c0_i32_1 = arith.constant 0 : i32
    return %c0_i32, %c0_i32_0 : i32, i32
  }
  func.func @transform_3(%arg0: i32) -> (i32, i32) {
    %c0_i32 = arith.constant 0 : i32
    %c0_i32_0 = arith.constant 0 : i32
    %c0_i32_1 = arith.constant 0 : i32
    return %c0_i32, %c0_i32_0 : i32, i32
  }
  func.func @transform_4(%arg0: i32) -> (i32, i32) {
    %c0_i32 = arith.constant 0 : i32
    %c0_i32_0 = arith.constant 0 : i32
    %c0_i32_1 = arith.constant 0 : i32
    return %c0_i32, %c0_i32_0 : i32, i32
  }
  func.func @transform_5(%arg0: i32) -> (i32, i32) {
    %c0_i32 = arith.constant 0 : i32
    %c0_i32_0 = arith.constant 0 : i32
    %c0_i32_1 = arith.constant 0 : i32
    return %c0_i32, %c0_i32_0 : i32, i32
  }
  func.func @transform_6(%arg0: i32) -> (i32, i32) {
    %c0_i32 = arith.constant 0 : i32
    %c0_i32_0 = arith.constant 0 : i32
    %c0_i32_1 = arith.constant 0 : i32
    return %c0_i32, %c0_i32_0 : i32, i32
  }
  func.func @transform_7(%arg0: i32) -> (i32, i32) {
    %c0_i32 = arith.constant 0 : i32
    %c0_i32_0 = arith.constant 0 : i32
    %c0_i32_1 = arith.constant 0 : i32
    return %c0_i32, %c0_i32_0 : i32, i32
  }
  func.func @transform_8(%arg0: i32) -> (i32, i32) {
    %c0_i32 = arith.constant 0 : i32
    %c0_i32_0 = arith.constant 0 : i32
    %c0_i32_1 = arith.constant 0 : i32
    return %c0_i32, %c0_i32_0 : i32, i32
  }
  func.func @transform_9(%arg0: i32) -> (i32, i32) {
    %c0_i32 = arith.constant 0 : i32
    %c0_i32_0 = arith.constant 0 : i32
    %c0_i32_1 = arith.constant 0 : i32
    return %c0_i32, %c0_i32_0 : i32, i32
  }
  func.func @transform_10(%arg0: i32) -> (i32, i32) {
    %c0_i32 = arith.constant 0 : i32
    %c0_i32_0 = arith.constant 0 : i32
    %c0_i32_1 = arith.constant 0 : i32
    return %c0_i32, %c0_i32_0 : i32, i32
  }
  func.func @transform_11(%arg0: i32) -> (i32, i32) {
    %c0_i32 = arith.constant 0 : i32
    %c0_i32_0 = arith.constant 0 : i32
    %c0_i32_1 = arith.constant 0 : i32
    return %c0_i32, %c0_i32_0 : i32, i32
  }
  func.func @transform_12(%arg0: i32) -> (i32, i32) {
    %c0_i32 = arith.constant 0 : i32
    %c0_i32_0 = arith.constant 0 : i32
    %c0_i32_1 = arith.constant 0 : i32
    return %c0_i32, %c0_i32_0 : i32, i32
  }
  func.func @transform_13(%arg0: i32) -> (i32, i32) {
    %c0_i32 = arith.constant 0 : i32
    %c0_i32_0 = arith.constant 0 : i32
    return %arg0, %c0_i32 : i32, i32
  }
}

</mosaic_0001>

<llo_original>
// kernel: tpu_custom_call.1
$region0: #{tpu_custom_call.1}
  #allocation0 [shape = 'u32[]', space=smem, size = 0x4, offset = 0x4, fixed_abs, tag = 'smem constant byte address 0x4 - core index']
  #allocation1 [shape = 'u32[144,128]{1,0:T(1,128)}', space=vmem, size = 0x12000, scoped, tag = 'internal scratch']
  #allocation2 [shape = 'bf16[8,32]{1,0:T(8,128)(2,1)}', space=vmem, size = 0x800, scoped, tag = 'scratch operand']
  %s0 = inlined_call_operand.vmem [shape: f32[16,32], index: 0, kind: input, shape index: {}]
  %s1 = inlined_call_operand.vmem [shape: f32[1,32], index: 1, kind: input, shape index: {}]
  %s2 = inlined_call_operand.vmem [shape: f32[1,32], index: 2, kind: input, shape index: {}]
  %s3 = inlined_call_operand.vmem [shape: bf16[32,96], index: 3, kind: input, shape index: {}]
  %s4 = inlined_call_operand.vmem [shape: f32[1,96], index: 4, kind: input, shape index: {}]
  %s5 = inlined_call_operand.vmem [shape: bf16[32,32], index: 5, kind: input, shape index: {}]
  %s6 = inlined_call_operand.vmem [shape: f32[1,32], index: 6, kind: input, shape index: {}]
  %s7 = inlined_call_operand.vmem [shape: f32[1,32], index: 7, kind: input, shape index: {}]
  %s8 = inlined_call_operand.vmem [shape: f32[1,32], index: 8, kind: input, shape index: {}]
  %s9 = inlined_call_operand.vmem [shape: bf16[32,128], index: 9, kind: input, shape index: {}]
  %s10 = inlined_call_operand.vmem [shape: f32[1,128], index: 10, kind: input, shape index: {}]
  %s11 = inlined_call_operand.vmem [shape: bf16[128,32], index: 11, kind: input, shape index: {}]
  %s12 = inlined_call_operand.vmem [shape: f32[1,32], index: 12, kind: input, shape index: {}]
  %s13 = inlined_call_operand.hbm [shape: f32[16,32], index: 13, kind: output, shape index: {}]
  %s14 = sld [smem:[#allocation0]]
  $region85: #{tpu_custom_call.1} parent=0
    _
  %s16 = ssub.s32 1, %s14
  %s17 = scalar_select 0, %s16, %s14
  $region1: #{tpu_custom_call.1} parent=0
    #allocation3 [shape = 'u8[8192]{0}', space=vmem, size = 0x2000, scoped, tag = 'output window, operand 0']
    #allocation4 [shape = 's32[2]{0}', space=sflag, size = 0x8, scoped, tag = 'scoped memory for tpu_custom_call.1']
    %18 = vsyncpa [#allocation4], 0
    %s19 = scalar_lea.sflag [#allocation4], 1
    %20 = vsyncpa %s19, 0
    loop: start=0, step=1, limit=4
    $region2: #{tpu_custom_call.1} parent=1 // loop_pre_header
      _
    $region3: #{tpu_custom_call.1} parent=1 // loop_header
      %s22 = sphi 0, %s26
      %p23 = scmp.ge.s32.totalorder %s22, 4
      %s32 = sphi 0, %s34
      %s35 = sphi 0, %s32
      %s36 = sphi 0, %s35
      %s52 = sphi 0, %s36
      %s56 = sphi 0, %s56
      %s58 = sphi 0, %s56
      %s59 = sphi 0, %s58
      %s73 = sphi 0, %s59
      %s77 = sphi 0, %s77
      %s79 = sphi 0, %s77
      %s80 = sphi 0, %s79
      %s94 = sphi 0, %s80
      %s98 = sphi 0, %s98
      %s100 = sphi 0, %s98
      %s101 = sphi 0, %s100
      %s115 = sphi 0, %s101
      %s119 = sphi 0, %s119
      %s121 = sphi 0, %s119
      %s122 = sphi 0, %s121
      %s136 = sphi 0, %s122
      %s140 = sphi 0, %s140
      %s142 = sphi 0, %s140
      %s143 = sphi 0, %s142
      %s157 = sphi 0, %s143
      %s161 = sphi 0, %s161
      %s163 = sphi 0, %s161
      %s164 = sphi 0, %s163
      %s178 = sphi 0, %s164
      %s182 = sphi 0, %s182
      %s184 = sphi 0, %s182
      %s185 = sphi 0, %s184
      %s199 = sphi 0, %s185
      %s203 = sphi 0, %s203
      %s205 = sphi 0, %s203
      %s206 = sphi 0, %s205
      %s220 = sphi 0, %s206
      %s224 = sphi 0, %s224
      %s226 = sphi 0, %s224
      %s227 = sphi 0, %s226
      %s241 = sphi 0, %s227
      %s245 = sphi 0, %s245
      %s247 = sphi 0, %s245
      %s248 = sphi 0, %s247
      %s262 = sphi 0, %s248
      %s266 = sphi 0, %s266
      %s268 = sphi 0, %s266
      %s269 = sphi 0, %s268
      %s283 = sphi 0, %s269
      %s287 = sphi 0, %s287
      %s289 = sphi 0, %s287
      %s290 = sphi 0, %s289
      %s304 = sphi 0, %s290
      %s310 = sphi 0, %s312
      %s313 = sphi 0, %s310
      %s314 = sphi 0, %s313
      %s330 = sphi 0, %s314
    $region4: #{tpu_custom_call.1} parent=1 // loop_header_branch
      %25 = sbr.rel (%p23) target = $region8
    $region5: #{tpu_custom_call.1} parent=1 // loop_body
      %s27 = ssub.s32 %s22, 1
      %s28 = ssub.s32 %s22, 2
      %s29 = sadd.s32 %s22, 1
      %s30 = ssub.s32 %s22, %s29
      %p31 = scmp.eq.s32.totalorder %s30, 0
      %s33 = sadd.s32 %s32, 1
      %s34 = scalar_select %p31, %s32, %s33
      %p37 = pneg %p31
      %p38 = scmp.eq.s32.totalorder %s22, 1
      %p39 = por %p37, %p38
      %p40 = scmp.ne.s32.totalorder %s32, %s35
      %p41 = scmp.eq.s32.totalorder %s22, 0
      %p42 = por %p40, %p41
      %p43 = scmp.ne.s32.totalorder %s32, %s35
      %p44 = scmp.eq.s32.totalorder %s27, 1
      %p45 = por %p43, %p44
      %p46 = scmp.ne.s32.totalorder %s35, %s36
      %p47 = scmp.eq.s32.totalorder %s27, 0
      %p48 = por %p46, %p47
      %p49 = scmp.ne.s32.totalorder %s35, %s36
      %p50 = scmp.eq.s32.totalorder %s28, 1
      %p51 = por %p49, %p50
      %p53 = scmp.ne.s32.totalorder %s36, %s52
      %p54 = scmp.eq.s32.totalorder %s28, 0
      %p55 = por %p53, %p54
      %s57 = sadd.s32 %s56, 1
      %p60 = scmp.eq.s32.totalorder %s22, 1
      %p61 = scmp.ne.s32.totalorder %s56, %s58
      %p62 = scmp.eq.s32.totalorder %s22, 0
      %p63 = por %p61, %p62
      %p64 = scmp.ne.s32.totalorder %s56, %s58
      %p65 = scmp.eq.s32.totalorder %s27, 1
      %p66 = por %p64, %p65
      %p67 = scmp.ne.s32.totalorder %s58, %s59
      %p68 = scmp.eq.s32.totalorder %s27, 0
      %p69 = por %p67, %p68
      %p70 = scmp.ne.s32.totalorder %s58, %s59
      %p71 = scmp.eq.s32.totalorder %s28, 1
      %p72 = por %p70, %p71
      %p74 = scmp.ne.s32.totalorder %s59, %s73
      %p75 = scmp.eq.s32.totalorder %s28, 0
      %p76 = por %p74, %p75
      %s78 = sadd.s32 %s77, 1
      %p81 = scmp.eq.s32.totalorder %s22, 1
      %p82 = scmp.ne.s32.totalorder %s77, %s79
      %p83 = scmp.eq.s32.totalorder %s22, 0
      %p84 = por %p82, %p83
      %p85 = scmp.ne.s32.totalorder %s77, %s79
      %p86 = scmp.eq.s32.totalorder %s27, 1
      %p87 = por %p85, %p86
      %p88 = scmp.ne.s32.totalorder %s79, %s80
      %p89 = scmp.eq.s32.totalorder %s27, 0
      %p90 = por %p88, %p89
      %p91 = scmp.ne.s32.totalorder %s79, %s80
      %p92 = scmp.eq.s32.totalorder %s28, 1
      %p93 = por %p91, %p92
      %p95 = scmp.ne.s32.totalorder %s80, %s94
      %p96 = scmp.eq.s32.totalorder %s28, 0
      %p97 = por %p95, %p96
      %s99 = sadd.s32 %s98, 1
      %p102 = scmp.eq.s32.totalorder %s22, 1
      %p103 = scmp.ne.s32.totalorder %s98, %s100
      %p104 = scmp.eq.s32.totalorder %s22, 0
      %p105 = por %p103, %p104
      %p106 = scmp.ne.s32.totalorder %s98, %s100
      %p107 = scmp.eq.s32.totalorder %s27, 1
      %p108 = por %p106, %p107
      %p109 = scmp.ne.s32.totalorder %s100, %s101
      %p110 = scmp.eq.s32.totalorder %s27, 0
      %p111 = por %p109, %p110
      %p112 = scmp.ne.s32.totalorder %s100, %s101
      %p113 = scmp.eq.s32.totalorder %s28, 1
      %p114 = por %p112, %p113
      %p116 = scmp.ne.s32.totalorder %s101, %s115
      %p117 = scmp.eq.s32.totalorder %s28, 0
      %p118 = por %p116, %p117
      %s120 = sadd.s32 %s119, 1
      %p123 = scmp.eq.s32.totalorder %s22, 1
      %p124 = scmp.ne.s32.totalorder %s119, %s121
      %p125 = scmp.eq.s32.totalorder %s22, 0
      %p126 = por %p124, %p125
      %p127 = scmp.ne.s32.totalorder %s119, %s121
      %p128 = scmp.eq.s32.totalorder %s27, 1
      %p129 = por %p127, %p128
      %p130 = scmp.ne.s32.totalorder %s121, %s122
      %p131 = scmp.eq.s32.totalorder %s27, 0
      %p132 = por %p130, %p131
      %p133 = scmp.ne.s32.totalorder %s121, %s122
      %p134 = scmp.eq.s32.totalorder %s28, 1
      %p135 = por %p133, %p134
      %p137 = scmp.ne.s32.totalorder %s122, %s136
      %p138 = scmp.eq.s32.totalorder %s28, 0
      %p139 = por %p137, %p138
      %s141 = sadd.s32 %s140, 1
      %p144 = scmp.eq.s32.totalorder %s22, 1
      %p145 = scmp.ne.s32.totalorder %s140, %s142
      %p146 = scmp.eq.s32.totalorder %s22, 0
      %p147 = por %p145, %p146
      %p148 = scmp.ne.s32.totalorder %s140, %s142
      %p149 = scmp.eq.s32.totalorder %s27, 1
      %p150 = por %p148, %p149
      %p151 = scmp.ne.s32.totalorder %s142, %s143
      %p152 = scmp.eq.s32.totalorder %s27, 0
      %p153 = por %p151, %p152
      %p154 = scmp.ne.s32.totalorder %s142, %s143
      %p155 = scmp.eq.s32.totalorder %s28, 1
      %p156 = por %p154, %p155
      %p158 = scmp.ne.s32.totalorder %s143, %s157
      %p159 = scmp.eq.s32.totalorder %s28, 0
      %p160 = por %p158, %p159
      %s162 = sadd.s32 %s161, 1
      %p165 = scmp.eq.s32.totalorder %s22, 1
      %p166 = scmp.ne.s32.totalorder %s161, %s163
      %p167 = scmp.eq.s32.totalorder %s22, 0
      %p168 = por %p166, %p167
      %p169 = scmp.ne.s32.totalorder %s161, %s163
      %p170 = scmp.eq.s32.totalorder %s27, 1
      %p171 = por %p169, %p170
      %p172 = scmp.ne.s32.totalorder %s163, %s164
      %p173 = scmp.eq.s32.totalorder %s27, 0
      %p174 = por %p172, %p173
      %p175 = scmp.ne.s32.totalorder %s163, %s164
      %p176 = scmp.eq.s32.totalorder %s28, 1
      %p177 = por %p175, %p176
      %p179 = scmp.ne.s32.totalorder %s164, %s178
      %p180 = scmp.eq.s32.totalorder %s28, 0
      %p181 = por %p179, %p180
      %s183 = sadd.s32 %s182, 1
      %p186 = scmp.eq.s32.totalorder %s22, 1
      %p187 = scmp.ne.s32.totalorder %s182, %s184
      %p188 = scmp.eq.s32.totalorder %s22, 0
      %p189 = por %p187, %p188
      %p190 = scmp.ne.s32.totalorder %s182, %s184
      %p191 = scmp.eq.s32.totalorder %s27, 1
      %p192 = por %p190, %p191
      %p193 = scmp.ne.s32.totalorder %s184, %s185
      %p194 = scmp.eq.s32.totalorder %s27, 0
      %p195 = por %p193, %p194
      %p196 = scmp.ne.s32.totalorder %s184, %s185
      %p197 = scmp.eq.s32.totalorder %s28, 1
      %p198 = por %p196, %p197
      %p200 = scmp.ne.s32.totalorder %s185, %s199
      %p201 = scmp.eq.s32.totalorder %s28, 0
      %p202 = por %p200, %p201
      %s204 = sadd.s32 %s203, 1
      %p207 = scmp.eq.s32.totalorder %s22, 1
      %p208 = scmp.ne.s32.totalorder %s203, %s205
      %p209 = scmp.eq.s32.totalorder %s22, 0
      %p210 = por %p208, %p209
      %p211 = scmp.ne.s32.totalorder %s203, %s205
      %p212 = scmp.eq.s32.totalorder %s27, 1
      %p213 = por %p211, %p212
      %p214 = scmp.ne.s32.totalorder %s205, %s206
      %p215 = scmp.eq.s32.totalorder %s27, 0
      %p216 = por %p214, %p215
      %p217 = scmp.ne.s32.totalorder %s205, %s206
      %p218 = scmp.eq.s32.totalorder %s28, 1
      %p219 = por %p217, %p218
      %p221 = scmp.ne.s32.totalorder %s206, %s220
      %p222 = scmp.eq.s32.totalorder %s28, 0
      %p223 = por %p221, %p222
      %s225 = sadd.s32 %s224, 1
      %p228 = scmp.eq.s32.totalorder %s22, 1
      %p229 = scmp.ne.s32.totalorder %s224, %s226
      %p230 = scmp.eq.s32.totalorder %s22, 0
      %p231 = por %p229, %p230
      %p232 = scmp.ne.s32.totalorder %s224, %s226
      %p233 = scmp.eq.s32.totalorder %s27, 1
      %p234 = por %p232, %p233
      %p235 = scmp.ne.s32.totalorder %s226, %s227
      %p236 = scmp.eq.s32.totalorder %s27, 0
      %p237 = por %p235, %p236
      %p238 = scmp.ne.s32.totalorder %s226, %s227
      %p239 = scmp.eq.s32.totalorder %s28, 1
      %p240 = por %p238, %p239
      %p242 = scmp.ne.s32.totalorder %s227, %s241
      %p243 = scmp.eq.s32.totalorder %s28, 0
      %p244 = por %p242, %p243
      %s246 = sadd.s32 %s245, 1
      %p249 = scmp.eq.s32.totalorder %s22, 1
      %p250 = scmp.ne.s32.totalorder %s245, %s247
      %p251 = scmp.eq.s32.totalorder %s22, 0
      %p252 = por %p250, %p251
      %p253 = scmp.ne.s32.totalorder %s245, %s247
      %p254 = scmp.eq.s32.totalorder %s27, 1
      %p255 = por %p253, %p254
      %p256 = scmp.ne.s32.totalorder %s247, %s248
      %p257 = scmp.eq.s32.totalorder %s27, 0
      %p258 = por %p256, %p257
      %p259 = scmp.ne.s32.totalorder %s247, %s248
      %p260 = scmp.eq.s32.totalorder %s28, 1
      %p261 = por %p259, %p260
      %p263 = scmp.ne.s32.totalorder %s248, %s262
      %p264 = scmp.eq.s32.totalorder %s28, 0
      %p265 = por %p263, %p264
      %s267 = sadd.s32 %s266, 1
      %p270 = scmp.eq.s32.totalorder %s22, 1
      %p271 = scmp.ne.s32.totalorder %s266, %s268
      %p272 = scmp.eq.s32.totalorder %s22, 0
      %p273 = por %p271, %p272
      %p274 = scmp.ne.s32.totalorder %s266, %s268
      %p275 = scmp.eq.s32.totalorder %s27, 1
      %p276 = por %p274, %p275
      %p277 = scmp.ne.s32.totalorder %s268, %s269
      %p278 = scmp.eq.s32.totalorder %s27, 0
      %p279 = por %p277, %p278
      %p280 = scmp.ne.s32.totalorder %s268, %s269
      %p281 = scmp.eq.s32.totalorder %s28, 1
      %p282 = por %p280, %p281
      %p284 = scmp.ne.s32.totalorder %s269, %s283
      %p285 = scmp.eq.s32.totalorder %s28, 0
      %p286 = por %p284, %p285
      %s288 = sadd.s32 %s287, 1
      %p291 = scmp.eq.s32.totalorder %s22, 1
      %p292 = scmp.ne.s32.totalorder %s287, %s289
      %p293 = scmp.eq.s32.totalorder %s22, 0
      %p294 = por %p292, %p293
      %p295 = scmp.ne.s32.totalorder %s287, %s289
      %p296 = scmp.eq.s32.totalorder %s27, 1
      %p297 = por %p295, %p296
      %p298 = scmp.ne.s32.totalorder %s289, %s290
      %p299 = scmp.eq.s32.totalorder %s27, 0
      %p300 = por %p298, %p299
      %p301 = scmp.ne.s32.totalorder %s289, %s290
      %p302 = scmp.eq.s32.totalorder %s28, 1
      %p303 = por %p301, %p302
      %p305 = scmp.ne.s32.totalorder %s290, %s304
      %p306 = scmp.eq.s32.totalorder %s28, 0
      %p307 = por %p305, %p306
      %s308 = ssub.s32 %s22, %s29
      %p309 = scmp.eq.s32.totalorder %s308, 0
      %s311 = sadd.s32 %s310, 1
      %s312 = scalar_select %p309, %s310, %s311
      %p315 = pneg %p309
      %p316 = scmp.eq.s32.totalorder %s22, 1
      %p317 = por %p315, %p316
      %p318 = scmp.ne.s32.totalorder %s310, %s313
      %p319 = scmp.eq.s32.totalorder %s22, 0
      %p320 = por %p318, %p319
      %p321 = scmp.ne.s32.totalorder %s310, %s313
      %p322 = scmp.eq.s32.totalorder %s27, 1
      %p323 = por %p321, %p322
      %p324 = scmp.ne.s32.totalorder %s313, %s314
      %p325 = scmp.eq.s32.totalorder %s27, 0
      %p326 = por %p324, %p325
      %p327 = scmp.ne.s32.totalorder %s313, %s314
      %p328 = scmp.eq.s32.totalorder %s28, 1
      %p329 = por %p327, %p328
      %p331 = scmp.ne.s32.totalorder %s314, %s330
      %p332 = scmp.eq.s32.totalorder %s28, 0
      %p333 = por %p331, %p332
      %p334 = scmp.le.s32.totalorder 1, %s22
      %p335 = scmp.lt.s32.totalorder %s22, 3
      %p336 = pnand %p334, %p335
      %p337 = pneg %p336
      // Predicated region
      $region9: #{tpu_custom_call.1} parent=5 // pred_check
        _
      $region10: #{tpu_custom_call.1} parent=5 // pred_check_branch
        %339 = sbr.rel (%p336) target = $region12
      $region11: #{tpu_custom_call.1} parent=5 // pred_region
        %s340 = ssub.s32 %s22, 1
        // Predicated region
        $region13: #{tpu_custom_call.1} parent=11 // pred_check
          %p341 = pneg %p69
        $region14: #{tpu_custom_call.1} parent=11 // pred_check_branch
          %343 = sbr.rel (%p341) target = $region16
        $region15: #{tpu_custom_call.1} parent=11 // pred_region
          _
        $region16: #{tpu_custom_call.1} parent=11 // pred_fallthru
          _
        // Predicated region
        $region17: #{tpu_custom_call.1} parent=11 // pred_check
          %p344 = pneg %p90
        $region18: #{tpu_custom_call.1} parent=11 // pred_check_branch
          %346 = sbr.rel (%p344) target = $region20
        $region19: #{tpu_custom_call.1} parent=11 // pred_region
          _
        $region20: #{tpu_custom_call.1} parent=11 // pred_fallthru
          _
        // Predicated region
        $region21: #{tpu_custom_call.1} parent=11 // pred_check
          %p347 = pneg %p111
        $region22: #{tpu_custom_call.1} parent=11 // pred_check_branch
          %349 = sbr.rel (%p347) target = $region24
        $region23: #{tpu_custom_call.1} parent=11 // pred_region
          _
        $region24: #{tpu_custom_call.1} parent=11 // pred_fallthru
          _
        // Predicated region
        $region25: #{tpu_custom_call.1} parent=11 // pred_check
          %p350 = pneg %p132
        $region26: #{tpu_custom_call.1} parent=11 // pred_check_branch
          %352 = sbr.rel (%p350) target = $region28
        $region27: #{tpu_custom_call.1} parent=11 // pred_region
          _
        $region28: #{tpu_custom_call.1} parent=11 // pred_fallthru
          _
        // Predicated region
        $region29: #{tpu_custom_call.1} parent=11 // pred_check
          %p353 = pneg %p153
        $region30: #{tpu_custom_call.1} parent=11 // pred_check_branch
          %355 = sbr.rel (%p353) target = $region32
        $region31: #{tpu_custom_call.1} parent=11 // pred_region
          _
        $region32: #{tpu_custom_call.1} parent=11 // pred_fallthru
          _
        // Predicated region
        $region33: #{tpu_custom_call.1} parent=11 // pred_check
          %p356 = pneg %p174
        $region34: #{tpu_custom_call.1} parent=11 // pred_check_branch
          %358 = sbr.rel (%p356) target = $region36
        $region35: #{tpu_custom_call.1} parent=11 // pred_region
          _
        $region36: #{tpu_custom_call.1} parent=11 // pred_fallthru
          _
        // Predicated region
        $region37: #{tpu_custom_call.1} parent=11 // pred_check
          %p359 = pneg %p195
        $region38: #{tpu_custom_call.1} parent=11 // pred_check_branch
          %361 = sbr.rel (%p359) target = $region40
        $region39: #{tpu_custom_call.1} parent=11 // pred_region
          _
        $region40: #{tpu_custom_call.1} parent=11 // pred_fallthru
          _
        // Predicated region
        $region41: #{tpu_custom_call.1} parent=11 // pred_check
          %p362 = pneg %p216
        $region42: #{tpu_custom_call.1} parent=11 // pred_check_branch
          %364 = sbr.rel (%p362) target = $region44
        $region43: #{tpu_custom_call.1} parent=11 // pred_region
          _
        $region44: #{tpu_custom_call.1} parent=11 // pred_fallthru
          _
        // Predicated region
        $region45: #{tpu_custom_call.1} parent=11 // pred_check
          %p365 = pneg %p237
        $region46: #{tpu_custom_call.1} parent=11 // pred_check_branch
          %367 = sbr.rel (%p365) target = $region48
        $region47: #{tpu_custom_call.1} parent=11 // pred_region
          _
        $region48: #{tpu_custom_call.1} parent=11 // pred_fallthru
          _
        // Predicated region
        $region49: #{tpu_custom_call.1} parent=11 // pred_check
          %p368 = pneg %p258
        $region50: #{tpu_custom_call.1} parent=11 // pred_check_branch
          %370 = sbr.rel (%p368) target = $region52
        $region51: #{tpu_custom_call.1} parent=11 // pred_region
          _
        $region52: #{tpu_custom_call.1} parent=11 // pred_fallthru
          _
        // Predicated region
        $region53: #{tpu_custom_call.1} parent=11 // pred_check
          %p371 = pneg %p279
        $region54: #{tpu_custom_call.1} parent=11 // pred_check_branch
          %373 = sbr.rel (%p371) target = $region56
        $region55: #{tpu_custom_call.1} parent=11 // pred_region
          _
        $region56: #{tpu_custom_call.1} parent=11 // pred_fallthru
          _
        // Predicated region
        $region57: #{tpu_custom_call.1} parent=11 // pred_check
          %p374 = pneg %p300
        $region58: #{tpu_custom_call.1} parent=11 // pred_check_branch
          %376 = sbr.rel (%p374) target = $region60
        $region59: #{tpu_custom_call.1} parent=11 // pred_region
          _
        $region60: #{tpu_custom_call.1} parent=11 // pred_fallthru
          _
      $region12: #{tpu_custom_call.1} parent=5 // pred_fallthru
        _
      %p377 = scmp.lt.s32.totalorder %s22, 2
      // Predicated region
      $region61: #{tpu_custom_call.1} parent=5 // pred_check
        %p378 = pneg %p377
      $region62: #{tpu_custom_call.1} parent=5 // pred_check_branch
        %380 = sbr.rel (%p378) target = $region64
      $region63: #{tpu_custom_call.1} parent=5 // pred_region
        // Predicated region
        $region65: #{tpu_custom_call.1} parent=63 // pred_check
          %p381 = pneg %p42
        $region66: #{tpu_custom_call.1} parent=63 // pred_check_branch
          %383 = sbr.rel (%p381) target = $region68
        $region67: #{tpu_custom_call.1} parent=63 // pred_region
          %p384 = scmp.lt.s32.totalorder %s22, 1
          %s385 = scalar_select %p384, %s22, 1
          %s386 = smul.addr %s385, 8
          %s387 = scalar_lea.vmem %s0, %s386
        $region68: #{tpu_custom_call.1} parent=63 // pred_fallthru
          _
      $region64: #{tpu_custom_call.1} parent=5 // pred_fallthru
        _
      %p388 = scmp.le.s32.totalorder 1, %s22
      %p389 = scmp.lt.s32.totalorder %s22, 3
      %p390 = pnand %p388, %p389
      %p391 = pneg %p390
      // Predicated region
      $region69: #{tpu_custom_call.1} parent=5 // pred_check
        _
      $region70: #{tpu_custom_call.1} parent=5 // pred_check_branch
        %393 = sbr.rel (%p390) target = $region72
      $region71: #{tpu_custom_call.1} parent=5 // pred_region
        %s394 = ssub.s32 %s22, 1
        %p395 = scmp.lt.s32.totalorder %s27, 1
        %s396 = scalar_select %p395, %s27, 1
        %s397 = smul.addr %s396, 8
        %s398 = scalar_lea.vmem %s0, %s397
        %p399 = pneg %p48
        %p400 = pneg %p45
        %p401 = pneg %p69
        %p402 = pneg %p66
        %p403 = pneg %p90
        %p404 = pneg %p87
        %p405 = pneg %p111
        %p406 = pneg %p108
        %p407 = pneg %p132
        %p408 = pneg %p129
        %p409 = pneg %p153
        %p410 = pneg %p150
        %p411 = pneg %p174
        %p412 = pneg %p171
        %p413 = pneg %p195
        %p414 = pneg %p192
        %p415 = pneg %p216
        %p416 = pneg %p213
        %p417 = pneg %p237
        %p418 = pneg %p234
        %p419 = pneg %p258
        %p420 = pneg %p255
        %p421 = pneg %p279
        %p422 = pneg %p276
        %p423 = pneg %p300
        %p424 = pneg %p297
        %p425 = pneg %p326
        %p426 = pneg %p323
        %s427 = sand.u32 %s313, 1
        %s428 = scalar_lea.sflag [#allocation4], %s427
        %s429 = sand.u32 %s313, 1
        %s430 = smul.addr %s429, 8
        %s431 = scalar_lea.vmem [#allocation3], %s430
        %p432 = scmp.lt.s32.totalorder %s27, 1
        %s433 = scalar_select %p432, %s27, 1
        %s434 = smul.addr %s433, 8
        %s435 = scalar_lea.vmem %s0, %s434
        %v437 = vld [vmem:[%s435] sm:$0xff]
        %v438 = vld [vmem:[%s1] sm:$0x1]
        %v439 = vld [vmem:[%s2] sm:$0x1]
        %vm440 = vcmask 261120
        %v441 = vsel %vm440, %v437, 0.0
        %442 = vadd.xlane.f32.xlu0 %v441
        %v443 = vpop.xlane.xlu0 %442
        %v444 = vrcp.pop 32.0
        %v445 = vmul.f32 %v443, %v444
        %v446 = vsub.f32 %v437, %v445
        %v447 = vmul.f32 %v446, %v446
        %v448 = vsel %vm440, %v447, 0.0
        %449 = vadd.xlane.f32.xlu0 %v448
        %v450 = vpop.xlane.xlu0 %449
        %v451 = vmul.f32 %v450, %v444
        %v452 = vadd.f32 %v451, 1e-05
        %v453 = vrsqrt.pop %v452
        %v454 = vmul.f32 %v446, %v453
        %v456 = vlaneseq
        %v457 = vshrl.u32 %v456, 7
        %v458 = vsub.s32 0, %v457
        %v459 = vrot.slane %v438, %v458
        %v461 = vmul.f32 %v454, %v459
        %v463 = vlaneseq
        %v464 = vshrl.u32 %v463, 7
        %v465 = vsub.s32 0, %v464
        %v466 = vrot.slane %v439, %v465
        %v468 = vadd.f32 %v461, %v466
        %v469 = vpack.c.bf16 %v468, %v468
        %v470 = vld [vmem:[%s3] sm:$0xf]
        %v471 = vld [vmem:[%s3 + $0x4] sm:$0xf]
        %v472 = vld [vmem:[%s3 + $0x8] sm:$0xf]
        %v473 = vld [vmem:[%s3 + $0xc] sm:$0xf]
        %v474 = vld [vmem:[%s4] sm:$0x1]
        %v476 = vlaneseq
        %v477 = vshrl.u32 %v476, 7
        %v478 = vsub.s32 0, %v477
        %v479 = vrot.slane %v474, %v478
        %v485 = vunpack.c.l.b16 %v470
        %v486 = vunpack.c.l.b16 %v471
        %v487 = vunpack.c.l.b16 %v472
        %v488 = vunpack.c.l.b16 %v473
        %v489 = vpack.c.b16 %v486, %v485
        %v490 = vpack.c.b16 %v488, %v487
        %v494 = vsel %vm440, %v469, 0
        %496 = vmatprep.subr.bf16.mxu0 0
        %497 = vmatpush1.bf16.msra.mxu0 %v489
        %498 = vmatprep.subr.bf16.mxu0 0
        %499 = vmatpush1.bf16.msra.mxu0 %v490
        %500 = vmatprep.subr.bf16.mxu0 0
        %501 = vmatpush1.bf16.msra.mxu0 0
        %502 = vmatprep.subr.bf16.mxu0 0
        %503 = vmatpush1.bf16.msra.mxu0 0
        %504 = vmatprep.subr.bf16.mxu0 0
        %505 = vmatpush1.bf16.msra.mxu0 0
        %506 = vmatprep.subr.bf16.mxu0 0
        %507 = vmatpush1.bf16.msra.mxu0 0
        %508 = vmatprep.subr.bf16.mxu0 0
        %509 = vmatpush1.bf16.msra.mxu0 0
        %510 = vmatprep.subr.bf16.mxu0 0
        %511 = vmatpush1.bf16.msra.mxu0 0
        %512 = vmatprep.subr.bf16.mxu0 0
        %513 = vmatpush1.bf16.msra.mxu0 0
        %514 = vmatprep.subr.bf16.mxu0 0
        %515 = vmatpush1.bf16.msra.mxu0 0
        %516 = vmatprep.subr.bf16.mxu0 0
        %517 = vmatpush1.bf16.msra.mxu0 0
        %518 = vmatprep.subr.bf16.mxu0 0
        %519 = vmatpush1.bf16.msra.mxu0 0
        %520 = vmatprep.subr.bf16.mxu0 0
        %521 = vmatpush1.bf16.msra.mxu0 0
        %522 = vmatprep.subr.bf16.mxu0 0
        %523 = vmatpush1.bf16.msra.mxu0 0
        %524 = vmatprep.subr.bf16.mxu0 0
        %525 = vmatpush1.bf16.msra.mxu0 0
        %526 = vmatprep.subr.bf16.mxu0 0
        %527 = vmatpush1.bf16.msra.mxu0 0
        %528 = vmatprep.mubr.bf16.mxu0 0
        %529 = vmatmul.mubr.bf16.gmra.mrb[0].mxu0 %v494
        %v530 = vpop.f32.mrb[0].mxu0
        %v531 = vadd.f32 %v479, %v530
        %v532 = vpop.f32.mrb[0].mxu0
        %v533 = vpop.f32.mrb[0].mxu0
        %v534 = vpop.f32.mrb[0].mxu0
        %535 = vdwg.mxu0
        %v536 = vlaneseq
        %v537 = vshrl.u32 %v536, 7
        %v538 = vlaneseq
        %v539 = vand.u32 %v538, 127
        %vm540 = vcmp.ge.s32.totalorder %v537, %v539
        %v541 = vmul.f32 %v531, 0.35355338
        %v542 = vpack.c.bf16 %v541, %v541
        %v543 = vpack.c.bf16 %v531, %v531
        %545 = vrot.lane.b32.xlu0 %v543, 96
        %v546 = vpop.permute.xlu0 %545
        %vm547 = vcmask 64512
        %v549 = vsel %vm547, %v542, 0
        %v552 = vsel %vm547, %v546, 0
        %554 = vmatprep.subr.bf16.mxu0 0
        %555 = vmatpush1.bf16.xpose.msra.mxu0 %v552
        %556 = vmatprep.subr.bf16.mxu0 0
        %557 = vmatpush1.bf16.xpose.msra.mxu0 0
        %558 = vmatprep.subr.bf16.mxu0 0
        %559 = vmatpush1.bf16.xpose.msra.mxu0 0
        %560 = vmatprep.subr.bf16.mxu0 0
        %561 = vmatpush1.bf16.xpose.msra.mxu0 0
        %562 = vmatprep.subr.bf16.mxu0 0
        %563 = vmatpush1.bf16.xpose.msra.mxu0 0
        %564 = vmatprep.subr.bf16.mxu0 0
        %565 = vmatpush1.bf16.xpose.msra.mxu0 0
        %566 = vmatprep.subr.bf16.mxu0 0
        %567 = vmatpush1.bf16.xpose.msra.mxu0 0
        %568 = vmatprep.subr.bf16.mxu0 0
        %569 = vmatpush1.bf16.xpose.msra.mxu0 0
        %570 = vmatprep.subr.bf16.mxu0 0
        %571 = vmatpush1.bf16.xpose.msra.mxu0 0
        %572 = vmatprep.subr.bf16.mxu0 0
        %573 = vmatpush1.bf16.xpose.msra.mxu0 0
        %574 = vmatprep.subr.bf16.mxu0 0
        %575 = vmatpush1.bf16.xpose.msra.mxu0 0
        %576 = vmatprep.subr.bf16.mxu0 0
        %577 = vmatpush1.bf16.xpose.msra.mxu0 0
        %578 = vmatprep.subr.bf16.mxu0 0
        %579 = vmatpush1.bf16.xpose.msra.mxu0 0
        %580 = vmatprep.subr.bf16.mxu0 0
        %581 = vmatpush1.bf16.xpose.msra.mxu0 0
        %582 = vmatprep.subr.bf16.mxu0 0
        %583 = vmatpush1.bf16.xpose.msra.mxu0 0
        %584 = vmatprep.subr.bf16.mxu0 0
        %585 = vmatpush1.bf16.xpose.msra.mxu0 0
        %586 = vmatprep.mubr.bf16.mxu0 0
        %587 = vmatmul.mubr.bf16.gmra.mrb[0].mxu0 %v549
        %v588 = vpop.f32.mrb[0].mxu0
        %v589 = vadd.f32 0.0, %v588
        %v590 = vpop.f32.mrb[0].mxu0
        %v591 = vpop.f32.mrb[0].mxu0
        %v592 = vpop.f32.mrb[0].mxu0
        %593 = vdwg.mxu0
        %v594 = vsel %vm540, %v589, -1e+30
        %v595 = vsel %vm547, %v594, -inf
        %596 = vmax.xlane.f32.xlu0 %v595
        %v597 = vpop.xlane.xlu0 %596
        %v598 = vsub.f32 %v594, %v597
        %v599 = vmul.f32 %v598, 1.442695
        %v600 = vpow.pop %v599
        %v601 = vsel %vm547, %v600, 0.0
        %602 = vadd.xlane.f32.xlu0 %v601
        %v603 = vpop.xlane.xlu0 %602
        %v604 = vrcp.pop %v603
        %v605 = vmul.f32 %v600, %v604
        %v606 = vpack.c.bf16 %v605, %v605
        %607 = vrot.lane.b32.xlu0 %v543, 64
        %v608 = vpop.permute.xlu0 %607
        %v610 = vsel %vm547, %v606, 0
        %vm612 = vcmask 1043456
        %v614 = vsel %vm612, %v608, 0
        %616 = vmatprep.subr.bf16.mxu0 0
        %617 = vmatpush1.bf16.msra.mxu0 %v614
        %618 = vmatprep.subr.bf16.mxu0 0
        %619 = vmatpush1.bf16.msra.mxu0 0
        %620 = vmatprep.subr.bf16.mxu0 0
        %621 = vmatpush1.bf16.msra.mxu0 0
        %622 = vmatprep.subr.bf16.mxu0 0
        %623 = vmatpush1.bf16.msra.mxu0 0
        %624 = vmatprep.subr.bf16.mxu0 0
        %625 = vmatpush1.bf16.msra.mxu0 0
        %626 = vmatprep.subr.bf16.mxu0 0
        %627 = vmatpush1.bf16.msra.mxu0 0
        %628 = vmatprep.subr.bf16.mxu0 0
        %629 = vmatpush1.bf16.msra.mxu0 0
        %630 = vmatprep.subr.bf16.mxu0 0
        %631 = vmatpush1.bf16.msra.mxu0 0
        %632 = vmatprep.subr.bf16.mxu0 0
        %633 = vmatpush1.bf16.msra.mxu0 0
        %634 = vmatprep.subr.bf16.mxu0 0
        %635 = vmatpush1.bf16.msra.mxu0 0
        %636 = vmatprep.subr.bf16.mxu0 0
        %637 = vmatpush1.bf16.msra.mxu0 0
        %638 = vmatprep.subr.bf16.mxu0 0
        %639 = vmatpush1.bf16.msra.mxu0 0
        %640 = vmatprep.subr.bf16.mxu0 0
        %641 = vmatpush1.bf16.msra.mxu0 0
        %642 = vmatprep.subr.bf16.mxu0 0
        %643 = vmatpush1.bf16.msra.mxu0 0
        %644 = vmatprep.subr.bf16.mxu0 0
        %645 = vmatpush1.bf16.msra.mxu0 0
        %646 = vmatprep.subr.bf16.mxu0 0
        %647 = vmatpush1.bf16.msra.mxu0 0
        %648 = vmatprep.mubr.bf16.mxu0 0
        %649 = vmatmul.mubr.bf16.gmra.mrb[0].mxu0 %v610
        %v650 = vpop.f32.mrb[0].mxu0
        %v651 = vadd.f32 0.0, %v650
        %v652 = vpop.f32.mrb[0].mxu0
        %v653 = vpop.f32.mrb[0].mxu0
        %v654 = vpop.f32.mrb[0].mxu0
        %655 = vdwg.mxu0
        %v656 = vpack.c.bf16 %v651, %v651
        %vm657 = vcmask 60416
        %658 = vst.msk [vmem:[#allocation2] sm:$0xf] %vm657, %v656
        %660 = vrot.lane.b32.xlu0 %v542, 120
        %v661 = vpop.permute.xlu0 %660
        %662 = vrot.lane.b32.xlu0 %v543, 88
        %v663 = vpop.permute.xlu0 %662
        %v665 = vsel %vm547, %v661, 0
        %v668 = vsel %vm547, %v663, 0
        %670 = vmatprep.subr.bf16.mxu0 0
        %671 = vmatpush1.bf16.xpose.msra.mxu0 %v668
        %672 = vmatprep.subr.bf16.mxu0 0
        %673 = vmatpush1.bf16.xpose.msra.mxu0 0
        %674 = vmatprep.subr.bf16.mxu0 0
        %675 = vmatpush1.bf16.xpose.msra.mxu0 0
        %676 = vmatprep.subr.bf16.mxu0 0
        %677 = vmatpush1.bf16.xpose.msra.mxu0 0
        %678 = vmatprep.subr.bf16.mxu0 0
        %679 = vmatpush1.bf16.xpose.msra.mxu0 0
        %680 = vmatprep.subr.bf16.mxu0 0
        %681 = vmatpush1.bf16.xpose.msra.mxu0 0
        %682 = vmatprep.subr.bf16.mxu0 0
        %683 = vmatpush1.bf16.xpose.msra.mxu0 0
        %684 = vmatprep.subr.bf16.mxu0 0
        %685 = vmatpush1.bf16.xpose.msra.mxu0 0
        %686 = vmatprep.subr.bf16.mxu0 0
        %687 = vmatpush1.bf16.xpose.msra.mxu0 0
        %688 = vmatprep.subr.bf16.mxu0 0
        %689 = vmatpush1.bf16.xpose.msra.mxu0 0
        %690 = vmatprep.subr.bf16.mxu0 0
        %691 = vmatpush1.bf16.xpose.msra.mxu0 0
        %692 = vmatprep.subr.bf16.mxu0 0
        %693 = vmatpush1.bf16.xpose.msra.mxu0 0
        %694 = vmatprep.subr.bf16.mxu0 0
        %695 = vmatpush1.bf16.xpose.msra.mxu0 0
        %696 = vmatprep.subr.bf16.mxu0 0
        %697 = vmatpush1.bf16.xpose.msra.mxu0 0
        %698 = vmatprep.subr.bf16.mxu0 0
        %699 = vmatpush1.bf16.xpose.msra.mxu0 0
        %700 = vmatprep.subr.bf16.mxu0 0
        %701 = vmatpush1.bf16.xpose.msra.mxu0 0
        %702 = vmatprep.mubr.bf16.mxu0 0
        %703 = vmatmul.mubr.bf16.gmra.mrb[0].mxu0 %v665
        %v704 = vpop.f32.mrb[0].mxu0
        %v705 = vadd.f32 0.0, %v704
        %v706 = vpop.f32.mrb[0].mxu0
        %v707 = vpop.f32.mrb[0].mxu0
        %v708 = vpop.f32.mrb[0].mxu0
        %709 = vdwg.mxu0
        %v710 = vsel %vm540, %v705, -1e+30
        %v711 = vsel %vm547, %v710, -inf
        %712 = vmax.xlane.f32.xlu0 %v711
        %v713 = vpop.xlane.xlu0 %712
        %v714 = vsub.f32 %v710, %v713
        %v715 = vmul.f32 %v714, 1.442695
        %v716 = vpow.pop %v715
        %v717 = vsel %vm547, %v716, 0.0
        %718 = vadd.xlane.f32.xlu0 %v717
        %v719 = vpop.xlane.xlu0 %718
        %v720 = vrcp.pop %v719
        %v721 = vmul.f32 %v716, %v720
        %v722 = vpack.c.bf16 %v721, %v721
        %723 = vrot.lane.b32.xlu0 %v543, 56
        %v724 = vpop.permute.xlu0 %723
        %v726 = vsel %vm547, %v722, 0
        %v729 = vsel %vm612, %v724, 0
        %731 = vmatprep.subr.bf16.mxu0 0
        %732 = vmatpush1.bf16.msra.mxu0 %v729
        %733 = vmatprep.subr.bf16.mxu0 0
        %734 = vmatpush1.bf16.msra.mxu0 0
        %735 = vmatprep.subr.bf16.mxu0 0
        %736 = vmatpush1.bf16.msra.mxu0 0
        %737 = vmatprep.subr.bf16.mxu0 0
        %738 = vmatpush1.bf16.msra.mxu0 0
        %739 = vmatprep.subr.bf16.mxu0 0
        %740 = vmatpush1.bf16.msra.mxu0 0
        %741 = vmatprep.subr.bf16.mxu0 0
        %742 = vmatpush1.bf16.msra.mxu0 0
        %743 = vmatprep.subr.bf16.mxu0 0
        %744 = vmatpush1.bf16.msra.mxu0 0
        %745 = vmatprep.subr.bf16.mxu0 0
        %746 = vmatpush1.bf16.msra.mxu0 0
        %747 = vmatprep.subr.bf16.mxu0 0
        %748 = vmatpush1.bf16.msra.mxu0 0
        %749 = vmatprep.subr.bf16.mxu0 0
        %750 = vmatpush1.bf16.msra.mxu0 0
        %751 = vmatprep.subr.bf16.mxu0 0
        %752 = vmatpush1.bf16.msra.mxu0 0
        %753 = vmatprep.subr.bf16.mxu0 0
        %754 = vmatpush1.bf16.msra.mxu0 0
        %755 = vmatprep.subr.bf16.mxu0 0
        %756 = vmatpush1.bf16.msra.mxu0 0
        %757 = vmatprep.subr.bf16.mxu0 0
        %758 = vmatpush1.bf16.msra.mxu0 0
        %759 = vmatprep.subr.bf16.mxu0 0
        %760 = vmatpush1.bf16.msra.mxu0 0
        %761 = vmatprep.subr.bf16.mxu0 0
        %762 = vmatpush1.bf16.msra.mxu0 0
        %763 = vmatprep.mubr.bf16.mxu0 0
        %764 = vmatmul.mubr.bf16.gmra.mrb[0].mxu0 %v726
        %v765 = vpop.f32.mrb[0].mxu0
        %v766 = vadd.f32 0.0, %v765
        %v767 = vpop.f32.mrb[0].mxu0
        %v768 = vpop.f32.mrb[0].mxu0
        %v769 = vpop.f32.mrb[0].mxu0
        %770 = vdwg.mxu0
        %v771 = vpack.c.bf16 %v766, %v766
        %v773 = vunpack.c.l.b16 %v771
        %v774 = vpack.c.b16 %v773, %v773
        %775 = vrot.lane.b32.xlu0 %v774, 8
        %v776 = vpop.permute.xlu0 %775
        %vm778 = vcmask 126016
        %779 = vst.msk [vmem:[#allocation2] sm:$0xf] %vm778, %v776
        %780 = vrot.lane.b32.xlu0 %v542, 112
        %v781 = vpop.permute.xlu0 %780
        %782 = vrot.lane.b32.xlu0 %v543, 80
        %v783 = vpop.permute.xlu0 %782
        %v785 = vsel %vm547, %v781, 0
        %v788 = vsel %vm547, %v783, 0
        %790 = vmatprep.subr.bf16.mxu0 0
        %791 = vmatpush1.bf16.xpose.msra.mxu0 %v788
        %792 = vmatprep.subr.bf16.mxu0 0
        %793 = vmatpush1.bf16.xpose.msra.mxu0 0
        %794 = vmatprep.subr.bf16.mxu0 0
        %795 = vmatpush1.bf16.xpose.msra.mxu0 0
        %796 = vmatprep.subr.bf16.mxu0 0
        %797 = vmatpush1.bf16.xpose.msra.mxu0 0
        %798 = vmatprep.subr.bf16.mxu0 0
        %799 = vmatpush1.bf16.xpose.msra.mxu0 0
        %800 = vmatprep.subr.bf16.mxu0 0
        %801 = vmatpush1.bf16.xpose.msra.mxu0 0
        %802 = vmatprep.subr.bf16.mxu0 0
        %803 = vmatpush1.bf16.xpose.msra.mxu0 0
        %804 = vmatprep.subr.bf16.mxu0 0
        %805 = vmatpush1.bf16.xpose.msra.mxu0 0
        %806 = vmatprep.subr.bf16.mxu0 0
        %807 = vmatpush1.bf16.xpose.msra.mxu0 0
        %808 = vmatprep.subr.bf16.mxu0 0
        %809 = vmatpush1.bf16.xpose.msra.mxu0 0
        %810 = vmatprep.subr.bf16.mxu0 0
        %811 = vmatpush1.bf16.xpose.msra.mxu0 0
        %812 = vmatprep.subr.bf16.mxu0 0
        %813 = vmatpush1.bf16.xpose.msra.mxu0 0
        %814 = vmatprep.subr.bf16.mxu0 0
        %815 = vmatpush1.bf16.xpose.msra.mxu0 0
        %816 = vmatprep.subr.bf16.mxu0 0
        %817 = vmatpush1.bf16.xpose.msra.mxu0 0
        %818 = vmatprep.subr.bf16.mxu0 0
        %819 = vmatpush1.bf16.xpose.msra.mxu0 0
        %820 = vmatprep.subr.bf16.mxu0 0
        %821 = vmatpush1.bf16.xpose.msra.mxu0 0
        %822 = vmatprep.mubr.bf16.mxu0 0
        %823 = vmatmul.mubr.bf16.gmra.mrb[0].mxu0 %v785
        %v824 = vpop.f32.mrb[0].mxu0
        %v825 = vadd.f32 0.0, %v824
        %v826 = vpop.f32.mrb[0].mxu0
        %v827 = vpop.f32.mrb[0].mxu0
        %v828 = vpop.f32.mrb[0].mxu0
        %829 = vdwg.mxu0
        %v830 = vsel %vm540, %v825, -1e+30
        %v831 = vsel %vm547, %v830, -inf
        %832 = vmax.xlane.f32.xlu0 %v831
        %v833 = vpop.xlane.xlu0 %832
        %v834 = vsub.f32 %v830, %v833
        %v835 = vmul.f32 %v834, 1.442695
        %v836 = vpow.pop %v835
        %v837 = vsel %vm547, %v836, 0.0
        %838 = vadd.xlane.f32.xlu0 %v837
        %v839 = vpop.xlane.xlu0 %838
        %v840 = vrcp.pop %v839
        %v841 = vmul.f32 %v836, %v840
        %v842 = vpack.c.bf16 %v841, %v841
        %843 = vrot.lane.b32.xlu0 %v543, 48
        %v844 = vpop.permute.xlu0 %843
        %v846 = vsel %vm547, %v842, 0
        %v849 = vsel %vm612, %v844, 0
        %851 = vmatprep.subr.bf16.mxu0 0
        %852 = vmatpush1.bf16.msra.mxu0 %v849
        %853 = vmatprep.subr.bf16.mxu0 0
        %854 = vmatpush1.bf16.msra.mxu0 0
        %855 = vmatprep.subr.bf16.mxu0 0
        %856 = vmatpush1.bf16.msra.mxu0 0
        %857 = vmatprep.subr.bf16.mxu0 0
        %858 = vmatpush1.bf16.msra.mxu0 0
        %859 = vmatprep.subr.bf16.mxu0 0
        %860 = vmatpush1.bf16.msra.mxu0 0
        %861 = vmatprep.subr.bf16.mxu0 0
        %862 = vmatpush1.bf16.msra.mxu0 0
        %863 = vmatprep.subr.bf16.mxu0 0
        %864 = vmatpush1.bf16.msra.mxu0 0
        %865 = vmatprep.subr.bf16.mxu0 0
        %866 = vmatpush1.bf16.msra.mxu0 0
        %867 = vmatprep.subr.bf16.mxu0 0
        %868 = vmatpush1.bf16.msra.mxu0 0
        %869 = vmatprep.subr.bf16.mxu0 0
        %870 = vmatpush1.bf16.msra.mxu0 0
        %871 = vmatprep.subr.bf16.mxu0 0
        %872 = vmatpush1.bf16.msra.mxu0 0
        %873 = vmatprep.subr.bf16.mxu0 0
        %874 = vmatpush1.bf16.msra.mxu0 0
        %875 = vmatprep.subr.bf16.mxu0 0
        %876 = vmatpush1.bf16.msra.mxu0 0
        %877 = vmatprep.subr.bf16.mxu0 0
        %878 = vmatpush1.bf16.msra.mxu0 0
        %879 = vmatprep.subr.bf16.mxu0 0
        %880 = vmatpush1.bf16.msra.mxu0 0
        %881 = vmatprep.subr.bf16.mxu0 0
        %882 = vmatpush1.bf16.msra.mxu0 0
        %883 = vmatprep.mubr.bf16.mxu0 0
        %884 = vmatmul.mubr.bf16.gmra.mrb[0].mxu0 %v846
        %v885 = vpop.f32.mrb[0].mxu0
        %v886 = vadd.f32 0.0, %v885
        %v887 = vpop.f32.mrb[0].mxu0
        %v888 = vpop.f32.mrb[0].mxu0
        %v889 = vpop.f32.mrb[0].mxu0
        %890 = vdwg.mxu0
        %v891 = vpack.c.bf16 %v886, %v886
        %v893 = vunpack.c.l.b16 %v891
        %v894 = vpack.c.b16 %v893, %v893
        %895 = vrot.lane.b32.xlu0 %v894, 16
        %v896 = vpop.permute.xlu0 %895
        %vm898 = vcmask 191616
        %899 = vst.msk [vmem:[#allocation2] sm:$0xf] %vm898, %v896
        %900 = vrot.lane.b32.xlu0 %v542, 104
        %v901 = vpop.permute.xlu0 %900
        %902 = vrot.lane.b32.xlu0 %v543, 72
        %v903 = vpop.permute.xlu0 %902
        %v905 = vsel %vm547, %v901, 0
        %v908 = vsel %vm547, %v903, 0
        %910 = vmatprep.subr.bf16.mxu0 0
        %911 = vmatpush1.bf16.xpose.msra.mxu0 %v908
        %912 = vmatprep.subr.bf16.mxu0 0
        %913 = vmatpush1.bf16.xpose.msra.mxu0 0
        %914 = vmatprep.subr.bf16.mxu0 0
        %915 = vmatpush1.bf16.xpose.msra.mxu0 0
        %916 = vmatprep.subr.bf16.mxu0 0
        %917 = vmatpush1.bf16.xpose.msra.mxu0 0
        %918 = vmatprep.subr.bf16.mxu0 0
        %919 = vmatpush1.bf16.xpose.msra.mxu0 0
        %920 = vmatprep.subr.bf16.mxu0 0
        %921 = vmatpush1.bf16.xpose.msra.mxu0 0
        %922 = vmatprep.subr.bf16.mxu0 0
        %923 = vmatpush1.bf16.xpose.msra.mxu0 0
        %924 = vmatprep.subr.bf16.mxu0 0
        %925 = vmatpush1.bf16.xpose.msra.mxu0 0
        %926 = vmatprep.subr.bf16.mxu0 0
        %927 = vmatpush1.bf16.xpose.msra.mxu0 0
        %928 = vmatprep.subr.bf16.mxu0 0
        %929 = vmatpush1.bf16.xpose.msra.mxu0 0
        %930 = vmatprep.subr.bf16.mxu0 0
        %931 = vmatpush1.bf16.xpose.msra.mxu0 0
        %932 = vmatprep.subr.bf16.mxu0 0
        %933 = vmatpush1.bf16.xpose.msra.mxu0 0
        %934 = vmatprep.subr.bf16.mxu0 0
        %935 = vmatpush1.bf16.xpose.msra.mxu0 0
        %936 = vmatprep.subr.bf16.mxu0 0
        %937 = vmatpush1.bf16.xpose.msra.mxu0 0
        %938 = vmatprep.subr.bf16.mxu0 0
        %939 = vmatpush1.bf16.xpose.msra.mxu0 0
        %940 = vmatprep.subr.bf16.mxu0 0
        %941 = vmatpush1.bf16.xpose.msra.mxu0 0
        %942 = vmatprep.mubr.bf16.mxu0 0
        %943 = vmatmul.mubr.bf16.gmra.mrb[0].mxu0 %v905
        %v944 = vpop.f32.mrb[0].mxu0
        %v945 = vadd.f32 0.0, %v944
        %v946 = vpop.f32.mrb[0].mxu0
        %v947 = vpop.f32.mrb[0].mxu0
        %v948 = vpop.f32.mrb[0].mxu0
        %949 = vdwg.mxu0
        %v950 = vsel %vm540, %v945, -1e+30
        %v951 = vsel %vm547, %v950, -inf
        %952 = vmax.xlane.f32.xlu0 %v951
        %v953 = vpop.xlane.xlu0 %952
        %v954 = vsub.f32 %v950, %v953
        %v955 = vmul.f32 %v954, 1.442695
        %v956 = vpow.pop %v955
        %v957 = vsel %vm547, %v956, 0.0
        %958 = vadd.xlane.f32.xlu0 %v957
        %v959 = vpop.xlane.xlu0 %958
        %v960 = vrcp.pop %v959
        %v961 = vmul.f32 %v956, %v960
        %v962 = vpack.c.bf16 %v961, %v961
        %963 = vrot.lane.b32.xlu0 %v543, 40
        %v964 = vpop.permute.xlu0 %963
        %v966 = vsel %vm547, %v962, 0
        %v969 = vsel %vm612, %v964, 0
        %971 = vmatprep.subr.bf16.mxu0 0
        %972 = vmatpush1.bf16.msra.mxu0 %v969
        %973 = vmatprep.subr.bf16.mxu0 0
        %974 = vmatpush1.bf16.msra.mxu0 0
        %975 = vmatprep.subr.bf16.mxu0 0
        %976 = vmatpush1.bf16.msra.mxu0 0
        %977 = vmatprep.subr.bf16.mxu0 0
        %978 = vmatpush1.bf16.msra.mxu0 0
        %979 = vmatprep.subr.bf16.mxu0 0
        %980 = vmatpush1.bf16.msra.mxu0 0
        %981 = vmatprep.subr.bf16.mxu0 0
        %982 = vmatpush1.bf16.msra.mxu0 0
        %983 = vmatprep.subr.bf16.mxu0 0
        %984 = vmatpush1.bf16.msra.mxu0 0
        %985 = vmatprep.subr.bf16.mxu0 0
        %986 = vmatpush1.bf16.msra.mxu0 0
        %987 = vmatprep.subr.bf16.mxu0 0
        %988 = vmatpush1.bf16.msra.mxu0 0
        %989 = vmatprep.subr.bf16.mxu0 0
        %990 = vmatpush1.bf16.msra.mxu0 0
        %991 = vmatprep.subr.bf16.mxu0 0
        %992 = vmatpush1.bf16.msra.mxu0 0
        %993 = vmatprep.subr.bf16.mxu0 0
        %994 = vmatpush1.bf16.msra.mxu0 0
        %995 = vmatprep.subr.bf16.mxu0 0
        %996 = vmatpush1.bf16.msra.mxu0 0
        %997 = vmatprep.subr.bf16.mxu0 0
        %998 = vmatpush1.bf16.msra.mxu0 0
        %999 = vmatprep.subr.bf16.mxu0 0
        %1000 = vmatpush1.bf16.msra.mxu0 0
        %1001 = vmatprep.subr.bf16.mxu0 0
        %1002 = vmatpush1.bf16.msra.mxu0 0
        %1003 = vmatprep.mubr.bf16.mxu0 0
        %1004 = vmatmul.mubr.bf16.gmra.mrb[0].mxu0 %v966
        %v1005 = vpop.f32.mrb[0].mxu0
        %v1006 = vadd.f32 0.0, %v1005
        %v1007 = vpop.f32.mrb[0].mxu0
        %v1008 = vpop.f32.mrb[0].mxu0
        %v1009 = vpop.f32.mrb[0].mxu0
        %1010 = vdwg.mxu0
        %v1011 = vpack.c.bf16 %v1006, %v1006
        %v1013 = vunpack.c.l.b16 %v1011
        %v1014 = vpack.c.b16 %v1013, %v1013
        %1015 = vrot.lane.b32.xlu0 %v1014, 24
        %v1016 = vpop.permute.xlu0 %1015
        %vm1018 = vcmask 257216
        %1019 = vst.msk [vmem:[#allocation2] sm:$0xf] %vm1018, %v1016
        %v1020 = vld [vmem:[#allocation2] sm:$0xf]
        %v1021 = vld [vmem:[%s5] sm:$0xf]
        %v1022 = vld [vmem:[%s5 + $0x4] sm:$0xf]
        %v1023 = vld [vmem:[%s5 + $0x8] sm:$0xf]
        %v1024 = vld [vmem:[%s5 + $0xc] sm:$0xf]
        %v1025 = vld [vmem:[%s6] sm:$0x1]
        %v1027 = vlaneseq
        %v1028 = vshrl.u32 %v1027, 7
        %v1029 = vsub.s32 0, %v1028
        %v1030 = vrot.slane %v1025, %v1029
        %v1036 = vunpack.c.l.b16 %v1021
        %v1037 = vunpack.c.l.b16 %v1022
        %v1038 = vunpack.c.l.b16 %v1023
        %v1039 = vunpack.c.l.b16 %v1024
        %v1040 = vpack.c.b16 %v1037, %v1036
        %v1041 = vpack.c.b16 %v1039, %v1038
        %v1045 = vsel %vm440, %v1020, 0
        %1047 = vmatprep.subr.bf16.mxu0 0
        %1048 = vmatpush1.bf16.msra.mxu0 %v1040
        %1049 = vmatprep.subr.bf16.mxu0 0
        %1050 = vmatpush1.bf16.msra.mxu0 %v1041
        %1051 = vmatprep.subr.bf16.mxu0 0
        %1052 = vmatpush1.bf16.msra.mxu0 0
        %1053 = vmatprep.subr.bf16.mxu0 0
        %1054 = vmatpush1.bf16.msra.mxu0 0
        %1055 = vmatprep.subr.bf16.mxu0 0
        %1056 = vmatpush1.bf16.msra.mxu0 0
        %1057 = vmatprep.subr.bf16.mxu0 0
        %1058 = vmatpush1.bf16.msra.mxu0 0
        %1059 = vmatprep.subr.bf16.mxu0 0
        %1060 = vmatpush1.bf16.msra.mxu0 0
        %1061 = vmatprep.subr.bf16.mxu0 0
        %1062 = vmatpush1.bf16.msra.mxu0 0
        %1063 = vmatprep.subr.bf16.mxu0 0
        %1064 = vmatpush1.bf16.msra.mxu0 0
        %1065 = vmatprep.subr.bf16.mxu0 0
        %1066 = vmatpush1.bf16.msra.mxu0 0
        %1067 = vmatprep.subr.bf16.mxu0 0
        %1068 = vmatpush1.bf16.msra.mxu0 0
        %1069 = vmatprep.subr.bf16.mxu0 0
        %1070 = vmatpush1.bf16.msra.mxu0 0
        %1071 = vmatprep.subr.bf16.mxu0 0
        %1072 = vmatpush1.bf16.msra.mxu0 0
        %1073 = vmatprep.subr.bf16.mxu0 0
        %1074 = vmatpush1.bf16.msra.mxu0 0
        %1075 = vmatprep.subr.bf16.mxu0 0
        %1076 = vmatpush1.bf16.msra.mxu0 0
        %1077 = vmatprep.subr.bf16.mxu0 0
        %1078 = vmatpush1.bf16.msra.mxu0 0
        %1079 = vmatprep.mubr.bf16.mxu0 0
        %1080 = vmatmul.mubr.bf16.gmra.mrb[0].mxu0 %v1045
        %v1081 = vpop.f32.mrb[0].mxu0
        %v1082 = vadd.f32 %v1030, %v1081
        %v1083 = vpop.f32.mrb[0].mxu0
        %v1084 = vpop.f32.mrb[0].mxu0
        %v1085 = vpop.f32.mrb[0].mxu0
        %1086 = vdwg.mxu0
        %v1087 = vadd.f32 %v437, %v1082
        %v1088 = vld [vmem:[%s7] sm:$0x1]
        %v1089 = vld [vmem:[%s8] sm:$0x1]
        %v1090 = vsel %vm440, %v1087, 0.0
        %1091 = vadd.xlane.f32.xlu0 %v1090
        %v1092 = vpop.xlane.xlu0 %1091
        %v1093 = vmul.f32 %v1092, %v444
        %v1094 = vsub.f32 %v1087, %v1093
        %v1095 = vmul.f32 %v1094, %v1094
        %v1096 = vsel %vm440, %v1095, 0.0
        %1097 = vadd.xlane.f32.xlu0 %v1096
        %v1098 = vpop.xlane.xlu0 %1097
        %v1099 = vmul.f32 %v1098, %v444
        %v1100 = vadd.f32 %v1099, 1e-05
        %v1101 = vrsqrt.pop %v1100
        %v1102 = vmul.f32 %v1094, %v1101
        %v1104 = vlaneseq
        %v1105 = vshrl.u32 %v1104, 7
        %v1106 = vsub.s32 0, %v1105
        %v1107 = vrot.slane %v1088, %v1106
        %v1109 = vmul.f32 %v1102, %v1107
        %v1111 = vlaneseq
        %v1112 = vshrl.u32 %v1111, 7
        %v1113 = vsub.s32 0, %v1112
        %v1114 = vrot.slane %v1089, %v1113
        %v1116 = vadd.f32 %v1109, %v1114
        %v1117 = vpack.c.bf16 %v1116, %v1116
        %v1118 = vld [vmem:[%s9] sm:$0xf]
        %v1119 = vld [vmem:[%s9 + $0x4] sm:$0xf]
        %v1120 = vld [vmem:[%s9 + $0x8] sm:$0xf]
        %v1121 = vld [vmem:[%s9 + $0xc] sm:$0xf]
        %v1122 = vld [vmem:[%s10] sm:$0x1]
        %v1124 = vlaneseq
        %v1125 = vshrl.u32 %v1124, 7
        %v1126 = vsub.s32 0, %v1125
        %v1127 = vrot.slane %v1122, %v1126
        %v1133 = vunpack.c.l.b16 %v1118
        %v1134 = vunpack.c.l.b16 %v1119
        %v1135 = vunpack.c.l.b16 %v1120
        %v1136 = vunpack.c.l.b16 %v1121
        %v1137 = vpack.c.b16 %v1134, %v1133
        %v1138 = vpack.c.b16 %v1136, %v1135
        %v1142 = vsel %vm440, %v1117, 0
        %1144 = vmatprep.subr.bf16.mxu0 0
        %1145 = vmatpush1.bf16.msra.mxu0 %v1137
        %1146 = vmatprep.subr.bf16.mxu0 0
        %1147 = vmatpush1.bf16.msra.mxu0 %v1138
        %1148 = vmatprep.subr.bf16.mxu0 0
        %1149 = vmatpush1.bf16.msra.mxu0 0
        %1150 = vmatprep.subr.bf16.mxu0 0
        %1151 = vmatpush1.bf16.msra.mxu0 0
        %1152 = vmatprep.subr.bf16.mxu0 0
        %1153 = vmatpush1.bf16.msra.mxu0 0
        %1154 = vmatprep.subr.bf16.mxu0 0
        %1155 = vmatpush1.bf16.msra.mxu0 0
        %1156 = vmatprep.subr.bf16.mxu0 0
        %1157 = vmatpush1.bf16.msra.mxu0 0
        %1158 = vmatprep.subr.bf16.mxu0 0
        %1159 = vmatpush1.bf16.msra.mxu0 0
        %1160 = vmatprep.subr.bf16.mxu0 0
        %1161 = vmatpush1.bf16.msra.mxu0 0
        %1162 = vmatprep.subr.bf16.mxu0 0
        %1163 = vmatpush1.bf16.msra.mxu0 0
        %1164 = vmatprep.subr.bf16.mxu0 0
        %1165 = vmatpush1.bf16.msra.mxu0 0
        %1166 = vmatprep.subr.bf16.mxu0 0
        %1167 = vmatpush1.bf16.msra.mxu0 0
        %1168 = vmatprep.subr.bf16.mxu0 0
        %1169 = vmatpush1.bf16.msra.mxu0 0
        %1170 = vmatprep.subr.bf16.mxu0 0
        %1171 = vmatpush1.bf16.msra.mxu0 0
        %1172 = vmatprep.subr.bf16.mxu0 0
        %1173 = vmatpush1.bf16.msra.mxu0 0
        %1174 = vmatprep.subr.bf16.mxu0 0
        %1175 = vmatpush1.bf16.msra.mxu0 0
        %1176 = vmatprep.mubr.bf16.mxu0 0
        %1177 = vmatmul.mubr.bf16.gmra.mrb[0].mxu0 %v1142
        %v1178 = vpop.f32.mrb[0].mxu0
        %v1179 = vadd.f32 %v1127, %v1178
        %v1180 = vpop.f32.mrb[0].mxu0
        %v1181 = vpop.f32.mrb[0].mxu0
        %v1182 = vpop.f32.mrb[0].mxu0
        %1183 = vdwg.mxu0
        %v1184 = vmul.f32 %v1179, 0.5
        %v1185 = vmul.f32 %v1179, 0.044715
        %v1186 = vmul.f32 %v1185, %v1179
        %v1187 = vmul.f32 %v1186, %v1179
        %v1188 = vadd.f32 %v1179, %v1187
        %v1189 = vmul.f32 %v1188, 0.7978846
        %v1190 = vtanh.pop %v1189
        %v1191 = vadd.f32 %v1190, 1.0
        %v1192 = vmul.f32 %v1184, %v1191
        %v1193 = vpack.c.bf16 %v1192, %v1192
        %v1194 = vld [vmem:[%s11] sm:$0xf]
        %v1195 = vld [vmem:[%s11 + $0x4] sm:$0xf]
        %v1196 = vld [vmem:[%s11 + $0x8] sm:$0xf]
        %v1197 = vld [vmem:[%s11 + $0xc] sm:$0xf]
        %v1198 = vld [vmem:[%s11 + $0x10] sm:$0xf]
        %v1199 = vld [vmem:[%s11 + $0x14] sm:$0xf]
        %v1200 = vld [vmem:[%s11 + $0x18] sm:$0xf]
        %v1201 = vld [vmem:[%s11 + $0x1c] sm:$0xf]
        %v1202 = vld [vmem:[%s11 + $0x20] sm:$0xf]
        %v1203 = vld [vmem:[%s11 + $0x24] sm:$0xf]
        %v1204 = vld [vmem:[%s11 + $0x28] sm:$0xf]
        %v1205 = vld [vmem:[%s11 + $0x2c] sm:$0xf]
        %v1206 = vld [vmem:[%s11 + $0x30] sm:$0xf]
        %v1207 = vld [vmem:[%s11 + $0x34] sm:$0xf]
        %v1208 = vld [vmem:[%s11 + $0x38] sm:$0xf]
        %v1209 = vld [vmem:[%s11 + $0x3c] sm:$0xf]
        %v1210 = vld [vmem:[%s12] sm:$0x1]
        %v1212 = vlaneseq
        %v1213 = vshrl.u32 %v1212, 7
        %v1214 = vsub.s32 0, %v1213
        %v1215 = vrot.slane %v1210, %v1214
        %v1233 = vunpack.c.l.b16 %v1194
        %v1234 = vunpack.c.l.b16 %v1195
        %v1235 = vunpack.c.l.b16 %v1196
        %v1236 = vunpack.c.l.b16 %v1197
        %v1237 = vunpack.c.l.b16 %v1198
        %v1238 = vunpack.c.l.b16 %v1199
        %v1239 = vunpack.c.l.b16 %v1200
        %v1240 = vunpack.c.l.b16 %v1201
        %v1241 = vunpack.c.l.b16 %v1202
        %v1242 = vunpack.c.l.b16 %v1203
        %v1243 = vunpack.c.l.b16 %v1204
        %v1244 = vunpack.c.l.b16 %v1205
        %v1245 = vunpack.c.l.b16 %v1206
        %v1246 = vunpack.c.l.b16 %v1207
        %v1247 = vunpack.c.l.b16 %v1208
        %v1248 = vunpack.c.l.b16 %v1209
        %v1249 = vpack.c.b16 %v1234, %v1233
        %v1250 = vpack.c.b16 %v1236, %v1235
        %v1251 = vpack.c.b16 %v1238, %v1237
        %v1252 = vpack.c.b16 %v1240, %v1239
        %v1253 = vpack.c.b16 %v1242, %v1241
        %v1254 = vpack.c.b16 %v1244, %v1243
        %v1255 = vpack.c.b16 %v1246, %v1245
        %v1256 = vpack.c.b16 %v1248, %v1247
        %1265 = vmatprep.subr.bf16.mxu0 0
        %1266 = vmatpush1.bf16.msra.mxu0 %v1249
        %1267 = vmatprep.subr.bf16.mxu0 0
        %1268 = vmatpush1.bf16.msra.mxu0 %v1250
        %1269 = vmatprep.subr.bf16.mxu0 0
        %1270 = vmatpush1.bf16.msra.mxu0 %v1251
        %1271 = vmatprep.subr.bf16.mxu0 0
        %1272 = vmatpush1.bf16.msra.mxu0 %v1252
        %1273 = vmatprep.subr.bf16.mxu0 0
        %1274 = vmatpush1.bf16.msra.mxu0 %v1253
        %1275 = vmatprep.subr.bf16.mxu0 0
        %1276 = vmatpush1.bf16.msra.mxu0 %v1254
        %1277 = vmatprep.subr.bf16.mxu0 0
        %1278 = vmatpush1.bf16.msra.mxu0 %v1255
        %1279 = vmatprep.subr.bf16.mxu0 0
        %1280 = vmatpush1.bf16.msra.mxu0 %v1256
        %1281 = vmatprep.subr.bf16.mxu0 0
        %1282 = vmatpush1.bf16.msra.mxu0 0
        %1283 = vmatprep.subr.bf16.mxu0 0
        %1284 = vmatpush1.bf16.msra.mxu0 0
        %1285 = vmatprep.subr.bf16.mxu0 0
        %1286 = vmatpush1.bf16.msra.mxu0 0
        %1287 = vmatprep.subr.bf16.mxu0 0
        %1288 = vmatpush1.bf16.msra.mxu0 0
        %1289 = vmatprep.subr.bf16.mxu0 0
        %1290 = vmatpush1.bf16.msra.mxu0 0
        %1291 = vmatprep.subr.bf16.mxu0 0
        %1292 = vmatpush1.bf16.msra.mxu0 0
        %1293 = vmatprep.subr.bf16.mxu0 0
        %1294 = vmatpush1.bf16.msra.mxu0 0
        %1295 = vmatprep.subr.bf16.mxu0 0
        %1296 = vmatpush1.bf16.msra.mxu0 0
        %1297 = vmatprep.mubr.bf16.mxu0 0
        %1298 = vmatmul.mubr.bf16.gmra.mrb[0].mxu0 %v1193
        %v1299 = vpop.f32.mrb[0].mxu0
        %v1300 = vadd.f32 %v1215, %v1299
        %v1301 = vpop.f32.mrb[0].mxu0
        %v1302 = vpop.f32.mrb[0].mxu0
        %v1303 = vpop.f32.mrb[0].mxu0
        %1304 = vdwg.mxu0
        %v1305 = vadd.f32 %v1087, %v1300
        %1306 = vst.msk [vmem:[%s431] sm:$0xff] %vm440, %v1305
        %s1307 = sand.u32 %s313, 1
        %s1308 = scalar_lea.sflag [#allocation4], %s1307
        %s1309 = sand.u32 %s313, 1
        %s1310 = smul.addr %s1309, 8
        %s1311 = scalar_lea.vmem [#allocation3], %s1310
        // Predicated region
        $region73: #{tpu_custom_call.1} parent=71 // pred_check
          %p1312 = pneg %p323
        $region74: #{tpu_custom_call.1} parent=71 // pred_check_branch
          %1314 = sbr.rel (%p1312) target = $region76
        $region75: #{tpu_custom_call.1} parent=71 // pred_region
          %s1316 = ssub.s32 128, 128
          %1317 = vsyncadd %s1308, %s1316
          %s1318 = smul.addr %s27, 128
          %s1319 = scalar_lea.hbm %s13, %s1318
          %s1321 = sshll.u32 %s1311, 4
          %s1322 = int_to_ptr.vmem [resolvable:$true] %s1321
          %1324 = dma.vmem_to_hbm [thread:$0]  %s1322, 128, %s1319, %s1308
        $region76: #{tpu_custom_call.1} parent=71 // pred_fallthru
          _
      $region72: #{tpu_custom_call.1} parent=5 // pred_fallthru
        _
      %p1325 = scmp.le.s32.totalorder 2, %s22
      // Predicated region
      $region77: #{tpu_custom_call.1} parent=5 // pred_check
        %p1326 = pneg %p1325
      $region78: #{tpu_custom_call.1} parent=5 // pred_check_branch
        %1328 = sbr.rel (%p1326) target = $region80
      $region79: #{tpu_custom_call.1} parent=5 // pred_region
        %s1329 = ssub.s32 %s22, 2
        // Predicated region
        $region81: #{tpu_custom_call.1} parent=79 // pred_check
          %p1330 = pneg %p329
        $region82: #{tpu_custom_call.1} parent=79 // pred_check_branch
          %1332 = sbr.rel (%p1330) target = $region84
        $region83: #{tpu_custom_call.1} parent=79 // pred_region
          %s1333 = sand.u32 %s314, 1
          %s1334 = scalar_lea.sflag [#allocation4], %s1333
          %s1335 = sand.u32 %s314, 1
          %s1336 = smul.addr %s1335, 8
          %s1337 = scalar_lea.vmem [#allocation3], %s1336
          %1338 = dma.done %s1334, 128
        $region84: #{tpu_custom_call.1} parent=79 // pred_fallthru
          _
      $region80: #{tpu_custom_call.1} parent=5 // pred_fallthru
        _
    $region6: #{tpu_custom_call.1} parent=1 // loop_footer
      %s26 = sadd.s32 1, %s22
    $region7: #{tpu_custom_call.1} parent=1 // loop_footer_branch
      %21 = sbr.rel target = $region3
    $region8: #{tpu_custom_call.1} parent=1 // loop_exit
      _
    %1339 = vsyncpa [#allocation4], 1
    %s1340 = scalar_lea.sflag [#allocation4], 1
    %1341 = vsyncpa %s1340, 1

</llo_original>
